<compile_context>
chip_gen: v7x
topology: tpu7x:2x2x1
jax: 0.10.0
libtpu: 0.0.40
codegen_flags: <defaults>
</compile_context>

<pallas_src>
import jax
import jax.numpy as jnp
from jax.experimental import pallas as pl
from jax.experimental.pallas import tpu as pltpu

HIDDEN_SIZE = 64
INPUT_SIZE = 1
TARGETS = 1
NEG_SLOPE = 0.01  # PyTorch nn.LeakyReLU default


def _leaky_relu(x):
    return jnp.where(x > 0, x, NEG_SLOPE * x)


def gru_mlp_kernel(x_ref,        # (T, B, 1)
                   wib_ref,      # (3, 3H): row0 = w_i_cat, row1 = b_i_cat, row2 = [0|0|b_hn]
                   whh_ref,      # (H, 3H) fused hidden weights (= W_hh.T), gate order r|z|n
                   w1_ref,       # (H, 32)
                   w2_ref,       # (32, 16)
                   w3_ref,       # (1, 16)
                   bmlp_ref,     # (1, 64): [b1(32) | b2(16) | b3(1) | pad]
                   out_ref):     # (B, 1)
    T = x_ref.shape[0]
    B = x_ref.shape[1]
    H = whh_ref.shape[0]
    H2 = 2 * H

    # Loop-invariant loads (small: 1.5 vregs each + 12 vregs for whh).
    w_i = wib_ref[0:1, :]        # (1, 3H)
    b_i = wib_ref[1:2, :]        # (1, 3H)  b_ir+b_hr | b_iz+b_hz | b_in
    b_post = wib_ref[2:3, :]     # (1, 3H)  0 | 0 | b_hn  (added after the matmul)
    whh = whh_ref[...]           # (H, 3H)

    # GRU recurrence, fully unrolled (T is small & static), h carried in vregs.
    h = jnp.zeros((B, H), jnp.float32)       # h_0 = 0 (gru(input, None))
    for t in range(T):
        # Input-path gates for this step only (VPU, independent of h -> overlaps MXU).
        a = x_ref[t] * w_i + b_i                                   # (B, 3H)
        # One fused MXU pass for all three hidden-path gates.
        hh = jnp.dot(h, whh, preferred_element_type=jnp.float32) + b_post  # (B, 3H)
        # r and z share one (B, 2H)=(B,128) vreg -> single sigmoid pass.
        rz = jax.nn.sigmoid(a[:, :H2] + hh[:, :H2])                # (B, 2H)
        r = rz[:, :H]
        z = rz[:, H:H2]
        n = jnp.tanh(a[:, H2:] + r * hh[:, H2:])                   # hh n-slice has b_hn
        h = n + z * (h - n)                                        # == (1-z)*n + z*h

    # output[:, -1, :] == h_T ; MLP head.
    n1 = w1_ref.shape[1]
    n2 = w2_ref.shape[1]
    b1 = bmlp_ref[:, :n1]
    b2 = bmlp_ref[:, n1:n1 + n2]
    b3 = bmlp_ref[:, n1 + n2:n1 + n2 + 1]

    y = jnp.dot(h, w1_ref[...], preferred_element_type=jnp.float32) + b1
    y = _leaky_relu(y)
    y = jnp.dot(y, w2_ref[...], preferred_element_type=jnp.float32) + b2
    y = _leaky_relu(y)
    # Final 16 -> 1 projection on VPU + lane reduction (skip a 1-wide MXU pass).
    y = jnp.sum(y * w3_ref[...], axis=-1, keepdims=True) + b3
    out_ref[...] = y.astype(out_ref.dtype)


def prepare_params(params):
    """One-time preprocessing of the PyTorch-layout parameters.

    Hoisted out of the per-call path: gate splits, transposes, bias folds and
    packing into a small number of lane-dense kernel inputs.
    """
    (w_ih, w_hh, b_ih, b_hh, w1, b1, w2, b2, w3, b3) = params
    H = HIDDEN_SIZE
    f32 = jnp.float32

    # Input-path weights: w_ih is (3H, 1); w_ih.T = (1, 3H) with lanes [w_ir|w_iz|w_in].
    w_i_cat = w_ih.astype(f32).T                                    # (1, 3H)
    # r/z biases folded (b_ih + b_hh); n keeps only b_in on the input path.
    b_i_cat = jnp.concatenate(
        [b_ih[:2 * H] + b_hh[:2 * H], b_ih[2 * H:]]).astype(f32)[None, :]   # (1, 3H)
    # b_hn is added to the hidden-path n gate AFTER the matmul (inside r * (...)).
    b_post = jnp.concatenate(
        [jnp.zeros((2 * H,), f32), b_hh[2 * H:].astype(f32)])[None, :]      # (1, 3H)
    wib = jnp.concatenate([w_i_cat, b_i_cat, b_post], axis=0)       # (3, 3H)

    # Fused hidden weights: (h @ w_hh.T)[:, gH:(g+1)H] == h @ W_hg.T, gate order r,z,n.
    whh = w_hh.astype(f32).T                                        # (H, 3H)

    # MLP weights (transposed once) and packed biases.
    w1t = w1.astype(f32).T                                          # (H, 32)
    w2t = w2.astype(f32).T                                          # (32, 16)
    w3r = w3.astype(f32)                                            # (1, 16)
    n1, n2, n3 = b1.shape[0], b2.shape[0], b3.shape[0]
    bmlp = jnp.zeros((1, 64), f32)
    bmlp = bmlp.at[0, :n1].set(b1.astype(f32))
    bmlp = bmlp.at[0, n1:n1 + n2].set(b2.astype(f32))
    bmlp = bmlp.at[0, n1 + n2:n1 + n2 + n3].set(b3.astype(f32))

    return (wib, whh, w1t, w2t, w3r, bmlp)


@jax.jit
def gru_forward(x, prepped):
    """x: (B, T, I) float32, batch_first like the PyTorch module.

    prepped: output of prepare_params() (computed once, reused every call).
    """
    wib, whh, w1t, w2t, w3r, bmlp = prepped
    B, T, I = x.shape
    assert I == INPUT_SIZE

    x_tb1 = jnp.transpose(x, (1, 0, 2))      # (T, B, 1) — 256 B, negligible

    vmem = pl.BlockSpec(memory_space=pltpu.MemorySpace.VMEM)
    return pl.pallas_call(
        gru_mlp_kernel,
        out_shape=jax.ShapeDtypeStruct((B, TARGETS), jnp.float32),
        in_specs=[vmem] * 7,
        out_specs=vmem,
    )(x_tb1, wib, whh, w1t, w2t, w3r, bmlp)


def init_params(key):
    """Deterministic init mimicking PyTorch defaults (uniform +/- 1/sqrt(fan))."""
    H, I = HIDDEN_SIZE, INPUT_SIZE
    ks = jax.random.split(key, 10)
    s_gru = 1.0 / jnp.sqrt(H)
    w_ih = jax.random.uniform(ks[0], (3 * H, I), jnp.float32, -s_gru, s_gru)
    w_hh = jax.random.uniform(ks[1], (3 * H, H), jnp.float32, -s_gru, s_gru)
    b_ih = jax.random.uniform(ks[2], (3 * H,), jnp.float32, -s_gru, s_gru)
    b_hh = jax.random.uniform(ks[3], (3 * H,), jnp.float32, -s_gru, s_gru)

    def lin(k, fan_in, fan_out):
        k1, k2 = jax.random.split(k)
        s = 1.0 / jnp.sqrt(fan_in)
        w = jax.random.uniform(k1, (fan_out, fan_in), jnp.float32, -s, s)
        b = jax.random.uniform(k2, (fan_out,), jnp.float32, -s, s)
        return w, b

    w1, b1 = lin(ks[4], H, 32)
    w2, b2 = lin(ks[5], 32, 16)
    w3, b3 = lin(ks[6], 16, TARGETS)
    return (w_ih, w_hh, b_ih, b_hh, w1, b1, w2, b2, w3, b3)


def reference_forward(x, params):
    """Pure-JAX reference of the PyTorch module for sanity checking."""
    (w_ih, w_hh, b_ih, b_hh, w1, b1, w2, b2, w3, b3) = params
    B, T, I = x.shape
    H = HIDDEN_SIZE
    h = jnp.zeros((B, H), jnp.float32)
    for t in range(T):
        x_t = x[:, t, :]
        gi = x_t @ w_ih.T + b_ih
        gh = h @ w_hh.T + b_hh
        i_r, i_z, i_n = gi[:, :H], gi[:, H:2 * H], gi[:, 2 * H:]
        h_r, h_z, h_n = gh[:, :H], gh[:, H:2 * H], gh[:, 2 * H:]
        r = jax.nn.sigmoid(i_r + h_r)
        z = jax.nn.sigmoid(i_z + h_z)
        n = jnp.tanh(i_n + r * h_n)
        h = (1.0 - z) * n + z * h
    y = _leaky_relu(h @ w1.T + b1)
    y = _leaky_relu(y @ w2.T + b2)
    return y @ w3.T + b3


if __name__ == "__main__":
    key = jax.random.PRNGKey(0)
    k_x, k_p = jax.random.split(key)

    B, T = 8, 8
    x = jax.random.normal(k_x, (B, T, INPUT_SIZE), jnp.float32)
    params = init_params(k_p)

    # One-time parameter preprocessing (hoisted out of the per-call hot path).
    prepped = jax.block_until_ready(prepare_params(params))

    out = gru_forward(x, prepped)
    out = jax.block_until_ready(out)

    ref = reference_forward(x, params)
    assert out.shape == (B, TARGETS)
    assert jnp.allclose(out, ref, atol=1e-4, rtol=1e-4), "mismatch vs reference"

    print("KERNEL_OK")
</pallas_src>

<mosaic_0001>
module attributes {stable_mosaic.version = 11 : i64} {
  func.func @gru_mlp_kernel(%arg0: memref<8x8x1xf32, #tpu.memory_space<vmem>>, %arg1: memref<3x192xf32, #tpu.memory_space<vmem>>, %arg2: memref<64x192xf32, #tpu.memory_space<vmem>>, %arg3: memref<64x32xf32, #tpu.memory_space<vmem>>, %arg4: memref<32x16xf32, #tpu.memory_space<vmem>>, %arg5: memref<1x16xf32, #tpu.memory_space<vmem>>, %arg6: memref<1x64xf32, #tpu.memory_space<vmem>>, %arg7: memref<8x1xf32, #tpu.memory_space<vmem>>) attributes {dimension_semantics = [], scalar_prefetch = 0 : i64, scratch_operands = 0 : i64, tpu.core_type = #tpu.core_type<tc>} {
    %c0 = arith.constant 0 : index
    %c0_0 = arith.constant 0 : index
    %0 = vector.load %arg1[%c0, %c0_0] : memref<3x192xf32, #tpu.memory_space<vmem>>, vector<1x192xf32>
    %c1 = arith.constant 1 : index
    %c0_1 = arith.constant 0 : index
    %1 = vector.load %arg1[%c1, %c0_1] : memref<3x192xf32, #tpu.memory_space<vmem>>, vector<1x192xf32>
    %c2 = arith.constant 2 : index
    %c0_2 = arith.constant 0 : index
    %2 = vector.load %arg1[%c2, %c0_2] : memref<3x192xf32, #tpu.memory_space<vmem>>, vector<1x192xf32>
    %c0_3 = arith.constant 0 : index
    %c0_4 = arith.constant 0 : index
    %3 = vector.load %arg2[%c0_3, %c0_4] : memref<64x192xf32, #tpu.memory_space<vmem>>, vector<64x192xf32>
    %cst = arith.constant 0.000000e+00 : f32
    %4 = vector.broadcast %cst : f32 to vector<8x64xf32>
    %c0_5 = arith.constant 0 : index
    %c0_6 = arith.constant 0 : index
    %c0_7 = arith.constant 0 : index
    %5 = vector.load %arg0[%c0_5, %c0_6, %c0_7] : memref<8x8x1xf32, #tpu.memory_space<vmem>>, vector<1x8x1xf32>
    %6 = vector.shape_cast %5 : vector<1x8x1xf32> to vector<8x1xf32>
    %7 = vector.broadcast %6 : vector<8x1xf32> to vector<8x192xf32>
    %8 = vector.broadcast %0 : vector<1x192xf32> to vector<8x192xf32>
    %9 = arith.mulf %7, %8 : vector<8x192xf32>
    %10 = vector.broadcast %1 : vector<1x192xf32> to vector<8x192xf32>
    %11 = arith.addf %9, %10 : vector<8x192xf32>
    %cst_8 = arith.constant dense<0.000000e+00> : vector<8x192xf32>
    %12 = tpu.matmul %4, %3, %cst_8 {dimension_numbers = #tpu.dot_dimension_numbers<[1], [0], [0], [1], [0, 0, 1, 1], [], []>} : vector<8x64xf32>, vector<64x192xf32>, vector<8x192xf32> -> vector<8x192xf32>
    %13 = vector.broadcast %2 : vector<1x192xf32> to vector<8x192xf32>
    %14 = arith.addf %12, %13 : vector<8x192xf32>
    %15 = vector.extract_strided_slice %11 {offsets = [0, 0], sizes = [8, 128], strides = [1, 1]} : vector<8x192xf32> to vector<8x128xf32>
    %16 = vector.extract_strided_slice %14 {offsets = [0, 0], sizes = [8, 128], strides = [1, 1]} : vector<8x192xf32> to vector<8x128xf32>
    %17 = arith.addf %15, %16 : vector<8x128xf32>
    %18 = arith.negf %17 : vector<8x128xf32>
    %19 = math.exp %18 : vector<8x128xf32>
    %cst_9 = arith.constant 1.000000e+00 : f32
    %20 = vector.broadcast %cst_9 : f32 to vector<8x128xf32>
    %21 = arith.addf %20, %19 : vector<8x128xf32>
    %22 = arith.divf %20, %21 : vector<8x128xf32>
    %23 = vector.extract_strided_slice %22 {offsets = [0, 0], sizes = [8, 64], strides = [1, 1]} : vector<8x128xf32> to vector<8x64xf32>
    %24 = vector.extract_strided_slice %22 {offsets = [0, 64], sizes = [8, 64], strides = [1, 1]} : vector<8x128xf32> to vector<8x64xf32>
    %25 = vector.extract_strided_slice %11 {offsets = [0, 128], sizes = [8, 64], strides = [1, 1]} : vector<8x192xf32> to vector<8x64xf32>
    %26 = vector.extract_strided_slice %14 {offsets = [0, 128], sizes = [8, 64], strides = [1, 1]} : vector<8x192xf32> to vector<8x64xf32>
    %27 = arith.mulf %23, %26 : vector<8x64xf32>
    %28 = arith.addf %25, %27 : vector<8x64xf32>
    %29 = math.tanh %28 : vector<8x64xf32>
    %30 = arith.subf %4, %29 : vector<8x64xf32>
    %31 = arith.mulf %24, %30 : vector<8x64xf32>
    %32 = arith.addf %29, %31 : vector<8x64xf32>
    %c1_10 = arith.constant 1 : index
    %c0_11 = arith.constant 0 : index
    %c0_12 = arith.constant 0 : index
    %33 = vector.load %arg0[%c1_10, %c0_11, %c0_12] : memref<8x8x1xf32, #tpu.memory_space<vmem>>, vector<1x8x1xf32>
    %34 = vector.shape_cast %33 : vector<1x8x1xf32> to vector<8x1xf32>
    %35 = vector.broadcast %34 : vector<8x1xf32> to vector<8x192xf32>
    %36 = vector.broadcast %0 : vector<1x192xf32> to vector<8x192xf32>
    %37 = arith.mulf %35, %36 : vector<8x192xf32>
    %38 = vector.broadcast %1 : vector<1x192xf32> to vector<8x192xf32>
    %39 = arith.addf %37, %38 : vector<8x192xf32>
    %cst_13 = arith.constant dense<0.000000e+00> : vector<8x192xf32>
    %40 = tpu.matmul %32, %3, %cst_13 {dimension_numbers = #tpu.dot_dimension_numbers<[1], [0], [0], [1], [0, 0, 1, 1], [], []>} : vector<8x64xf32>, vector<64x192xf32>, vector<8x192xf32> -> vector<8x192xf32>
    %41 = vector.broadcast %2 : vector<1x192xf32> to vector<8x192xf32>
    %42 = arith.addf %40, %41 : vector<8x192xf32>
    %43 = vector.extract_strided_slice %39 {offsets = [0, 0], sizes = [8, 128], strides = [1, 1]} : vector<8x192xf32> to vector<8x128xf32>
    %44 = vector.extract_strided_slice %42 {offsets = [0, 0], sizes = [8, 128], strides = [1, 1]} : vector<8x192xf32> to vector<8x128xf32>
    %45 = arith.addf %43, %44 : vector<8x128xf32>
    %46 = arith.negf %45 : vector<8x128xf32>
    %47 = math.exp %46 : vector<8x128xf32>
    %cst_14 = arith.constant 1.000000e+00 : f32
    %48 = vector.broadcast %cst_14 : f32 to vector<8x128xf32>
    %49 = arith.addf %48, %47 : vector<8x128xf32>
    %50 = arith.divf %48, %49 : vector<8x128xf32>
    %51 = vector.extract_strided_slice %50 {offsets = [0, 0], sizes = [8, 64], strides = [1, 1]} : vector<8x128xf32> to vector<8x64xf32>
    %52 = vector.extract_strided_slice %50 {offsets = [0, 64], sizes = [8, 64], strides = [1, 1]} : vector<8x128xf32> to vector<8x64xf32>
    %53 = vector.extract_strided_slice %39 {offsets = [0, 128], sizes = [8, 64], strides = [1, 1]} : vector<8x192xf32> to vector<8x64xf32>
    %54 = vector.extract_strided_slice %42 {offsets = [0, 128], sizes = [8, 64], strides = [1, 1]} : vector<8x192xf32> to vector<8x64xf32>
    %55 = arith.mulf %51, %54 : vector<8x64xf32>
    %56 = arith.addf %53, %55 : vector<8x64xf32>
    %57 = math.tanh %56 : vector<8x64xf32>
    %58 = arith.subf %32, %57 : vector<8x64xf32>
    %59 = arith.mulf %52, %58 : vector<8x64xf32>
    %60 = arith.addf %57, %59 : vector<8x64xf32>
    %c2_15 = arith.constant 2 : index
    %c0_16 = arith.constant 0 : index
    %c0_17 = arith.constant 0 : index
    %61 = vector.load %arg0[%c2_15, %c0_16, %c0_17] : memref<8x8x1xf32, #tpu.memory_space<vmem>>, vector<1x8x1xf32>
    %62 = vector.shape_cast %61 : vector<1x8x1xf32> to vector<8x1xf32>
    %63 = vector.broadcast %62 : vector<8x1xf32> to vector<8x192xf32>
    %64 = vector.broadcast %0 : vector<1x192xf32> to vector<8x192xf32>
    %65 = arith.mulf %63, %64 : vector<8x192xf32>
    %66 = vector.broadcast %1 : vector<1x192xf32> to vector<8x192xf32>
    %67 = arith.addf %65, %66 : vector<8x192xf32>
    %cst_18 = arith.constant dense<0.000000e+00> : vector<8x192xf32>
    %68 = tpu.matmul %60, %3, %cst_18 {dimension_numbers = #tpu.dot_dimension_numbers<[1], [0], [0], [1], [0, 0, 1, 1], [], []>} : vector<8x64xf32>, vector<64x192xf32>, vector<8x192xf32> -> vector<8x192xf32>
    %69 = vector.broadcast %2 : vector<1x192xf32> to vector<8x192xf32>
    %70 = arith.addf %68, %69 : vector<8x192xf32>
    %71 = vector.extract_strided_slice %67 {offsets = [0, 0], sizes = [8, 128], strides = [1, 1]} : vector<8x192xf32> to vector<8x128xf32>
    %72 = vector.extract_strided_slice %70 {offsets = [0, 0], sizes = [8, 128], strides = [1, 1]} : vector<8x192xf32> to vector<8x128xf32>
    %73 = arith.addf %71, %72 : vector<8x128xf32>
    %74 = arith.negf %73 : vector<8x128xf32>
    %75 = math.exp %74 : vector<8x128xf32>
    %cst_19 = arith.constant 1.000000e+00 : f32
    %76 = vector.broadcast %cst_19 : f32 to vector<8x128xf32>
    %77 = arith.addf %76, %75 : vector<8x128xf32>
    %78 = arith.divf %76, %77 : vector<8x128xf32>
    %79 = vector.extract_strided_slice %78 {offsets = [0, 0], sizes = [8, 64], strides = [1, 1]} : vector<8x128xf32> to vector<8x64xf32>
    %80 = vector.extract_strided_slice %78 {offsets = [0, 64], sizes = [8, 64], strides = [1, 1]} : vector<8x128xf32> to vector<8x64xf32>
    %81 = vector.extract_strided_slice %67 {offsets = [0, 128], sizes = [8, 64], strides = [1, 1]} : vector<8x192xf32> to vector<8x64xf32>
    %82 = vector.extract_strided_slice %70 {offsets = [0, 128], sizes = [8, 64], strides = [1, 1]} : vector<8x192xf32> to vector<8x64xf32>
    %83 = arith.mulf %79, %82 : vector<8x64xf32>
    %84 = arith.addf %81, %83 : vector<8x64xf32>
    %85 = math.tanh %84 : vector<8x64xf32>
    %86 = arith.subf %60, %85 : vector<8x64xf32>
    %87 = arith.mulf %80, %86 : vector<8x64xf32>
    %88 = arith.addf %85, %87 : vector<8x64xf32>
    %c3 = arith.constant 3 : index
    %c0_20 = arith.constant 0 : index
    %c0_21 = arith.constant 0 : index
    %89 = vector.load %arg0[%c3, %c0_20, %c0_21] : memref<8x8x1xf32, #tpu.memory_space<vmem>>, vector<1x8x1xf32>
    %90 = vector.shape_cast %89 : vector<1x8x1xf32> to vector<8x1xf32>
    %91 = vector.broadcast %90 : vector<8x1xf32> to vector<8x192xf32>
    %92 = vector.broadcast %0 : vector<1x192xf32> to vector<8x192xf32>
    %93 = arith.mulf %91, %92 : vector<8x192xf32>
    %94 = vector.broadcast %1 : vector<1x192xf32> to vector<8x192xf32>
    %95 = arith.addf %93, %94 : vector<8x192xf32>
    %cst_22 = arith.constant dense<0.000000e+00> : vector<8x192xf32>
    %96 = tpu.matmul %88, %3, %cst_22 {dimension_numbers = #tpu.dot_dimension_numbers<[1], [0], [0], [1], [0, 0, 1, 1], [], []>} : vector<8x64xf32>, vector<64x192xf32>, vector<8x192xf32> -> vector<8x192xf32>
    %97 = vector.broadcast %2 : vector<1x192xf32> to vector<8x192xf32>
    %98 = arith.addf %96, %97 : vector<8x192xf32>
    %99 = vector.extract_strided_slice %95 {offsets = [0, 0], sizes = [8, 128], strides = [1, 1]} : vector<8x192xf32> to vector<8x128xf32>
    %100 = vector.extract_strided_slice %98 {offsets = [0, 0], sizes = [8, 128], strides = [1, 1]} : vector<8x192xf32> to vector<8x128xf32>
    %101 = arith.addf %99, %100 : vector<8x128xf32>
    %102 = arith.negf %101 : vector<8x128xf32>
    %103 = math.exp %102 : vector<8x128xf32>
    %cst_23 = arith.constant 1.000000e+00 : f32
    %104 = vector.broadcast %cst_23 : f32 to vector<8x128xf32>
    %105 = arith.addf %104, %103 : vector<8x128xf32>
    %106 = arith.divf %104, %105 : vector<8x128xf32>
    %107 = vector.extract_strided_slice %106 {offsets = [0, 0], sizes = [8, 64], strides = [1, 1]} : vector<8x128xf32> to vector<8x64xf32>
    %108 = vector.extract_strided_slice %106 {offsets = [0, 64], sizes = [8, 64], strides = [1, 1]} : vector<8x128xf32> to vector<8x64xf32>
    %109 = vector.extract_strided_slice %95 {offsets = [0, 128], sizes = [8, 64], strides = [1, 1]} : vector<8x192xf32> to vector<8x64xf32>
    %110 = vector.extract_strided_slice %98 {offsets = [0, 128], sizes = [8, 64], strides = [1, 1]} : vector<8x192xf32> to vector<8x64xf32>
    %111 = arith.mulf %107, %110 : vector<8x64xf32>
    %112 = arith.addf %109, %111 : vector<8x64xf32>
    %113 = math.tanh %112 : vector<8x64xf32>
    %114 = arith.subf %88, %113 : vector<8x64xf32>
    %115 = arith.mulf %108, %114 : vector<8x64xf32>
    %116 = arith.addf %113, %115 : vector<8x64xf32>
    %c4 = arith.constant 4 : index
    %c0_24 = arith.constant 0 : index
    %c0_25 = arith.constant 0 : index
    %117 = vector.load %arg0[%c4, %c0_24, %c0_25] : memref<8x8x1xf32, #tpu.memory_space<vmem>>, vector<1x8x1xf32>
    %118 = vector.shape_cast %117 : vector<1x8x1xf32> to vector<8x1xf32>
    %119 = vector.broadcast %118 : vector<8x1xf32> to vector<8x192xf32>
    %120 = vector.broadcast %0 : vector<1x192xf32> to vector<8x192xf32>
    %121 = arith.mulf %119, %120 : vector<8x192xf32>
    %122 = vector.broadcast %1 : vector<1x192xf32> to vector<8x192xf32>
    %123 = arith.addf %121, %122 : vector<8x192xf32>
    %cst_26 = arith.constant dense<0.000000e+00> : vector<8x192xf32>
    %124 = tpu.matmul %116, %3, %cst_26 {dimension_numbers = #tpu.dot_dimension_numbers<[1], [0], [0], [1], [0, 0, 1, 1], [], []>} : vector<8x64xf32>, vector<64x192xf32>, vector<8x192xf32> -> vector<8x192xf32>
    %125 = vector.broadcast %2 : vector<1x192xf32> to vector<8x192xf32>
    %126 = arith.addf %124, %125 : vector<8x192xf32>
    %127 = vector.extract_strided_slice %123 {offsets = [0, 0], sizes = [8, 128], strides = [1, 1]} : vector<8x192xf32> to vector<8x128xf32>
    %128 = vector.extract_strided_slice %126 {offsets = [0, 0], sizes = [8, 128], strides = [1, 1]} : vector<8x192xf32> to vector<8x128xf32>
    %129 = arith.addf %127, %128 : vector<8x128xf32>
    %130 = arith.negf %129 : vector<8x128xf32>
    %131 = math.exp %130 : vector<8x128xf32>
    %cst_27 = arith.constant 1.000000e+00 : f32
    %132 = vector.broadcast %cst_27 : f32 to vector<8x128xf32>
    %133 = arith.addf %132, %131 : vector<8x128xf32>
    %134 = arith.divf %132, %133 : vector<8x128xf32>
    %135 = vector.extract_strided_slice %134 {offsets = [0, 0], sizes = [8, 64], strides = [1, 1]} : vector<8x128xf32> to vector<8x64xf32>
    %136 = vector.extract_strided_slice %134 {offsets = [0, 64], sizes = [8, 64], strides = [1, 1]} : vector<8x128xf32> to vector<8x64xf32>
    %137 = vector.extract_strided_slice %123 {offsets = [0, 128], sizes = [8, 64], strides = [1, 1]} : vector<8x192xf32> to vector<8x64xf32>
    %138 = vector.extract_strided_slice %126 {offsets = [0, 128], sizes = [8, 64], strides = [1, 1]} : vector<8x192xf32> to vector<8x64xf32>
    %139 = arith.mulf %135, %138 : vector<8x64xf32>
    %140 = arith.addf %137, %139 : vector<8x64xf32>
    %141 = math.tanh %140 : vector<8x64xf32>
    %142 = arith.subf %116, %141 : vector<8x64xf32>
    %143 = arith.mulf %136, %142 : vector<8x64xf32>
    %144 = arith.addf %141, %143 : vector<8x64xf32>
    %c5 = arith.constant 5 : index
    %c0_28 = arith.constant 0 : index
    %c0_29 = arith.constant 0 : index
    %145 = vector.load %arg0[%c5, %c0_28, %c0_29] : memref<8x8x1xf32, #tpu.memory_space<vmem>>, vector<1x8x1xf32>
    %146 = vector.shape_cast %145 : vector<1x8x1xf32> to vector<8x1xf32>
    %147 = vector.broadcast %146 : vector<8x1xf32> to vector<8x192xf32>
    %148 = vector.broadcast %0 : vector<1x192xf32> to vector<8x192xf32>
    %149 = arith.mulf %147, %148 : vector<8x192xf32>
    %150 = vector.broadcast %1 : vector<1x192xf32> to vector<8x192xf32>
    %151 = arith.addf %149, %150 : vector<8x192xf32>
    %cst_30 = arith.constant dense<0.000000e+00> : vector<8x192xf32>
    %152 = tpu.matmul %144, %3, %cst_30 {dimension_numbers = #tpu.dot_dimension_numbers<[1], [0], [0], [1], [0, 0, 1, 1], [], []>} : vector<8x64xf32>, vector<64x192xf32>, vector<8x192xf32> -> vector<8x192xf32>
    %153 = vector.broadcast %2 : vector<1x192xf32> to vector<8x192xf32>
    %154 = arith.addf %152, %153 : vector<8x192xf32>
    %155 = vector.extract_strided_slice %151 {offsets = [0, 0], sizes = [8, 128], strides = [1, 1]} : vector<8x192xf32> to vector<8x128xf32>
    %156 = vector.extract_strided_slice %154 {offsets = [0, 0], sizes = [8, 128], strides = [1, 1]} : vector<8x192xf32> to vector<8x128xf32>
    %157 = arith.addf %155, %156 : vector<8x128xf32>
    %158 = arith.negf %157 : vector<8x128xf32>
    %159 = math.exp %158 : vector<8x128xf32>
    %cst_31 = arith.constant 1.000000e+00 : f32
    %160 = vector.broadcast %cst_31 : f32 to vector<8x128xf32>
    %161 = arith.addf %160, %159 : vector<8x128xf32>
    %162 = arith.divf %160, %161 : vector<8x128xf32>
    %163 = vector.extract_strided_slice %162 {offsets = [0, 0], sizes = [8, 64], strides = [1, 1]} : vector<8x128xf32> to vector<8x64xf32>
    %164 = vector.extract_strided_slice %162 {offsets = [0, 64], sizes = [8, 64], strides = [1, 1]} : vector<8x128xf32> to vector<8x64xf32>
    %165 = vector.extract_strided_slice %151 {offsets = [0, 128], sizes = [8, 64], strides = [1, 1]} : vector<8x192xf32> to vector<8x64xf32>
    %166 = vector.extract_strided_slice %154 {offsets = [0, 128], sizes = [8, 64], strides = [1, 1]} : vector<8x192xf32> to vector<8x64xf32>
    %167 = arith.mulf %163, %166 : vector<8x64xf32>
    %168 = arith.addf %165, %167 : vector<8x64xf32>
    %169 = math.tanh %168 : vector<8x64xf32>
    %170 = arith.subf %144, %169 : vector<8x64xf32>
    %171 = arith.mulf %164, %170 : vector<8x64xf32>
    %172 = arith.addf %169, %171 : vector<8x64xf32>
    %c6 = arith.constant 6 : index
    %c0_32 = arith.constant 0 : index
    %c0_33 = arith.constant 0 : index
    %173 = vector.load %arg0[%c6, %c0_32, %c0_33] : memref<8x8x1xf32, #tpu.memory_space<vmem>>, vector<1x8x1xf32>
    %174 = vector.shape_cast %173 : vector<1x8x1xf32> to vector<8x1xf32>
    %175 = vector.broadcast %174 : vector<8x1xf32> to vector<8x192xf32>
    %176 = vector.broadcast %0 : vector<1x192xf32> to vector<8x192xf32>
    %177 = arith.mulf %175, %176 : vector<8x192xf32>
    %178 = vector.broadcast %1 : vector<1x192xf32> to vector<8x192xf32>
    %179 = arith.addf %177, %178 : vector<8x192xf32>
    %cst_34 = arith.constant dense<0.000000e+00> : vector<8x192xf32>
    %180 = tpu.matmul %172, %3, %cst_34 {dimension_numbers = #tpu.dot_dimension_numbers<[1], [0], [0], [1], [0, 0, 1, 1], [], []>} : vector<8x64xf32>, vector<64x192xf32>, vector<8x192xf32> -> vector<8x192xf32>
    %181 = vector.broadcast %2 : vector<1x192xf32> to vector<8x192xf32>
    %182 = arith.addf %180, %181 : vector<8x192xf32>
    %183 = vector.extract_strided_slice %179 {offsets = [0, 0], sizes = [8, 128], strides = [1, 1]} : vector<8x192xf32> to vector<8x128xf32>
    %184 = vector.extract_strided_slice %182 {offsets = [0, 0], sizes = [8, 128], strides = [1, 1]} : vector<8x192xf32> to vector<8x128xf32>
    %185 = arith.addf %183, %184 : vector<8x128xf32>
    %186 = arith.negf %185 : vector<8x128xf32>
    %187 = math.exp %186 : vector<8x128xf32>
    %cst_35 = arith.constant 1.000000e+00 : f32
    %188 = vector.broadcast %cst_35 : f32 to vector<8x128xf32>
    %189 = arith.addf %188, %187 : vector<8x128xf32>
    %190 = arith.divf %188, %189 : vector<8x128xf32>
    %191 = vector.extract_strided_slice %190 {offsets = [0, 0], sizes = [8, 64], strides = [1, 1]} : vector<8x128xf32> to vector<8x64xf32>
    %192 = vector.extract_strided_slice %190 {offsets = [0, 64], sizes = [8, 64], strides = [1, 1]} : vector<8x128xf32> to vector<8x64xf32>
    %193 = vector.extract_strided_slice %179 {offsets = [0, 128], sizes = [8, 64], strides = [1, 1]} : vector<8x192xf32> to vector<8x64xf32>
    %194 = vector.extract_strided_slice %182 {offsets = [0, 128], sizes = [8, 64], strides = [1, 1]} : vector<8x192xf32> to vector<8x64xf32>
    %195 = arith.mulf %191, %194 : vector<8x64xf32>
    %196 = arith.addf %193, %195 : vector<8x64xf32>
    %197 = math.tanh %196 : vector<8x64xf32>
    %198 = arith.subf %172, %197 : vector<8x64xf32>
    %199 = arith.mulf %192, %198 : vector<8x64xf32>
    %200 = arith.addf %197, %199 : vector<8x64xf32>
    %c7 = arith.constant 7 : index
    %c0_36 = arith.constant 0 : index
    %c0_37 = arith.constant 0 : index
    %201 = vector.load %arg0[%c7, %c0_36, %c0_37] : memref<8x8x1xf32, #tpu.memory_space<vmem>>, vector<1x8x1xf32>
    %202 = vector.shape_cast %201 : vector<1x8x1xf32> to vector<8x1xf32>
    %203 = vector.broadcast %202 : vector<8x1xf32> to vector<8x192xf32>
    %204 = vector.broadcast %0 : vector<1x192xf32> to vector<8x192xf32>
    %205 = arith.mulf %203, %204 : vector<8x192xf32>
    %206 = vector.broadcast %1 : vector<1x192xf32> to vector<8x192xf32>
    %207 = arith.addf %205, %206 : vector<8x192xf32>
    %cst_38 = arith.constant dense<0.000000e+00> : vector<8x192xf32>
    %208 = tpu.matmul %200, %3, %cst_38 {dimension_numbers = #tpu.dot_dimension_numbers<[1], [0], [0], [1], [0, 0, 1, 1], [], []>} : vector<8x64xf32>, vector<64x192xf32>, vector<8x192xf32> -> vector<8x192xf32>
    %209 = vector.broadcast %2 : vector<1x192xf32> to vector<8x192xf32>
    %210 = arith.addf %208, %209 : vector<8x192xf32>
    %211 = vector.extract_strided_slice %207 {offsets = [0, 0], sizes = [8, 128], strides = [1, 1]} : vector<8x192xf32> to vector<8x128xf32>
    %212 = vector.extract_strided_slice %210 {offsets = [0, 0], sizes = [8, 128], strides = [1, 1]} : vector<8x192xf32> to vector<8x128xf32>
    %213 = arith.addf %211, %212 : vector<8x128xf32>
    %214 = arith.negf %213 : vector<8x128xf32>
    %215 = math.exp %214 : vector<8x128xf32>
    %cst_39 = arith.constant 1.000000e+00 : f32
    %216 = vector.broadcast %cst_39 : f32 to vector<8x128xf32>
    %217 = arith.addf %216, %215 : vector<8x128xf32>
    %218 = arith.divf %216, %217 : vector<8x128xf32>
    %219 = vector.extract_strided_slice %218 {offsets = [0, 0], sizes = [8, 64], strides = [1, 1]} : vector<8x128xf32> to vector<8x64xf32>
    %220 = vector.extract_strided_slice %218 {offsets = [0, 64], sizes = [8, 64], strides = [1, 1]} : vector<8x128xf32> to vector<8x64xf32>
    %221 = vector.extract_strided_slice %207 {offsets = [0, 128], sizes = [8, 64], strides = [1, 1]} : vector<8x192xf32> to vector<8x64xf32>
    %222 = vector.extract_strided_slice %210 {offsets = [0, 128], sizes = [8, 64], strides = [1, 1]} : vector<8x192xf32> to vector<8x64xf32>
    %223 = arith.mulf %219, %222 : vector<8x64xf32>
    %224 = arith.addf %221, %223 : vector<8x64xf32>
    %225 = math.tanh %224 : vector<8x64xf32>
    %226 = arith.subf %200, %225 : vector<8x64xf32>
    %227 = arith.mulf %220, %226 : vector<8x64xf32>
    %228 = arith.addf %225, %227 : vector<8x64xf32>
    %c0_40 = arith.constant 0 : index
    %c0_41 = arith.constant 0 : index
    %229 = vector.load %arg6[%c0_40, %c0_41] : memref<1x64xf32, #tpu.memory_space<vmem>>, vector<1x32xf32>
    %c0_42 = arith.constant 0 : index
    %c32 = arith.constant 32 : index
    %230 = vector.load %arg6[%c0_42, %c32] : memref<1x64xf32, #tpu.memory_space<vmem>>, vector<1x16xf32>
    %c0_43 = arith.constant 0 : index
    %c48 = arith.constant 48 : index
    %231 = vector.load %arg6[%c0_43, %c48] : memref<1x64xf32, #tpu.memory_space<vmem>>, vector<1x1xf32>
    %c0_44 = arith.constant 0 : index
    %c0_45 = arith.constant 0 : index
    %232 = vector.load %arg3[%c0_44, %c0_45] : memref<64x32xf32, #tpu.memory_space<vmem>>, vector<64x32xf32>
    %cst_46 = arith.constant dense<0.000000e+00> : vector<8x32xf32>
    %233 = tpu.matmul %228, %232, %cst_46 {dimension_numbers = #tpu.dot_dimension_numbers<[1], [0], [0], [1], [0, 0, 1, 1], [], []>} : vector<8x64xf32>, vector<64x32xf32>, vector<8x32xf32> -> vector<8x32xf32>
    %234 = vector.broadcast %229 : vector<1x32xf32> to vector<8x32xf32>
    %235 = arith.addf %233, %234 : vector<8x32xf32>
    %cst_47 = arith.constant 0.000000e+00 : f32
    %236 = vector.broadcast %cst_47 : f32 to vector<8x32xf32>
    %237 = arith.cmpf ogt, %235, %236 : vector<8x32xf32>
    %cst_48 = arith.constant 0.00999999977 : f32
    %238 = vector.broadcast %cst_48 : f32 to vector<8x32xf32>
    %239 = arith.mulf %238, %235 : vector<8x32xf32>
    %240 = arith.select %237, %235, %239 : vector<8x32xi1>, vector<8x32xf32>
    %c0_49 = arith.constant 0 : index
    %c0_50 = arith.constant 0 : index
    %241 = vector.load %arg4[%c0_49, %c0_50] : memref<32x16xf32, #tpu.memory_space<vmem>>, vector<32x16xf32>
    %cst_51 = arith.constant dense<0.000000e+00> : vector<8x16xf32>
    %242 = tpu.matmul %240, %241, %cst_51 {dimension_numbers = #tpu.dot_dimension_numbers<[1], [0], [0], [1], [0, 0, 1, 1], [], []>} : vector<8x32xf32>, vector<32x16xf32>, vector<8x16xf32> -> vector<8x16xf32>
    %243 = vector.broadcast %230 : vector<1x16xf32> to vector<8x16xf32>
    %244 = arith.addf %242, %243 : vector<8x16xf32>
    %cst_52 = arith.constant 0.000000e+00 : f32
    %245 = vector.broadcast %cst_52 : f32 to vector<8x16xf32>
    %246 = arith.cmpf ogt, %244, %245 : vector<8x16xf32>
    %cst_53 = arith.constant 0.00999999977 : f32
    %247 = vector.broadcast %cst_53 : f32 to vector<8x16xf32>
    %248 = arith.mulf %247, %244 : vector<8x16xf32>
    %249 = arith.select %246, %244, %248 : vector<8x16xi1>, vector<8x16xf32>
    %c0_54 = arith.constant 0 : index
    %c0_55 = arith.constant 0 : index
    %250 = vector.load %arg5[%c0_54, %c0_55] : memref<1x16xf32, #tpu.memory_space<vmem>>, vector<1x16xf32>
    %251 = vector.broadcast %250 : vector<1x16xf32> to vector<8x16xf32>
    %252 = arith.mulf %249, %251 : vector<8x16xf32>
    %cst_56 = arith.constant dense<0.000000e+00> : vector<8xf32>
    %253 = vector.multi_reduction <add>, %252, %cst_56 [1] : vector<8x16xf32> to vector<8xf32>
    %254 = vector.shape_cast %253 : vector<8xf32> to vector<8x1xf32>
    %255 = vector.broadcast %231 : vector<1x1xf32> to vector<8x1xf32>
    %256 = arith.addf %254, %255 : vector<8x1xf32>
    %c0_57 = arith.constant 0 : index
    %c0_58 = arith.constant 0 : index
    %257 = vector.load %arg7[%c0_57, %c0_58] : memref<8x1xf32, #tpu.memory_space<vmem>>, vector<8x1xf32>
    tpu.vector_store %arg7[%c0_57, %c0_58], %256 {strides = array<i32>} : memref<8x1xf32, #tpu.memory_space<vmem>>, vector<8x1xf32>,
    return
  }
}

</mosaic_0001>

<llo_original>
// kernel: gru_forward.1
$region0: #{gru_forward.1}
  #allocation0 [shape = 'u32[]', space=smem, size = 0x4, offset = 0x4, fixed_abs, tag = 'smem constant byte address 0x4 - core index']
  #allocation1 [shape = 'u32[144,128]{1,0:T(1,128)}', space=vmem, size = 0x12000, scoped, tag = 'internal scratch']
  %s0 = inlined_call_operand.vmem [shape: f32[8,8,1], index: 0, kind: input, shape index: {}]
  %s1 = inlined_call_operand.vmem [shape: f32[3,192], index: 1, kind: input, shape index: {}]
  %s2 = inlined_call_operand.vmem [shape: f32[64,192], index: 2, kind: input, shape index: {}]
  %s3 = inlined_call_operand.vmem [shape: f32[64,32], index: 3, kind: input, shape index: {}]
  %s4 = inlined_call_operand.vmem [shape: f32[32,16], index: 4, kind: input, shape index: {}]
  %s5 = inlined_call_operand.vmem [shape: f32[1,16], index: 5, kind: input, shape index: {}]
  %s6 = inlined_call_operand.vmem [shape: f32[1,64], index: 6, kind: input, shape index: {}]
  %s7 = inlined_call_operand.vmem [shape: f32[8,1], index: 7, kind: output, shape index: {}]
  %s8 = sld [smem:[#allocation0]]
  $region38: #{gru_forward.1} parent=0
    _
  %s10 = ssub.s32 1, %s8
  %s11 = scalar_select 0, %s10, %s8
  // Predicated region
  $region2: #{gru_forward.1} parent=0 // pred_check
    _
  $region3: #{gru_forward.1} parent=0 // pred_check_branch
    %13 = sbr.rel (0) target = $region5
  $region4: #{gru_forward.1} parent=0 // pred_region
    _
  $region5: #{gru_forward.1} parent=0 // pred_fallthru
    _
  // Predicated region
  $region6: #{gru_forward.1} parent=0 // pred_check
    _
  $region7: #{gru_forward.1} parent=0 // pred_check_branch
    %15 = sbr.rel (0) target = $region9
  $region8: #{gru_forward.1} parent=0 // pred_region
    _
  $region9: #{gru_forward.1} parent=0 // pred_fallthru
    _
  // Predicated region
  $region10: #{gru_forward.1} parent=0 // pred_check
    _
  $region11: #{gru_forward.1} parent=0 // pred_check_branch
    %17 = sbr.rel (0) target = $region13
  $region12: #{gru_forward.1} parent=0 // pred_region
    _
  $region13: #{gru_forward.1} parent=0 // pred_fallthru
    _
  // Predicated region
  $region14: #{gru_forward.1} parent=0 // pred_check
    _
  $region15: #{gru_forward.1} parent=0 // pred_check_branch
    %19 = sbr.rel (0) target = $region17
  $region16: #{gru_forward.1} parent=0 // pred_region
    _
  $region17: #{gru_forward.1} parent=0 // pred_fallthru
    _
  // Predicated region
  $region18: #{gru_forward.1} parent=0 // pred_check
    _
  $region19: #{gru_forward.1} parent=0 // pred_check_branch
    %21 = sbr.rel (0) target = $region21
  $region20: #{gru_forward.1} parent=0 // pred_region
    _
  $region21: #{gru_forward.1} parent=0 // pred_fallthru
    _
  // Predicated region
  $region22: #{gru_forward.1} parent=0 // pred_check
    _
  $region23: #{gru_forward.1} parent=0 // pred_check_branch
    %23 = sbr.rel (0) target = $region25
  $region24: #{gru_forward.1} parent=0 // pred_region
    _
  $region25: #{gru_forward.1} parent=0 // pred_fallthru
    _
  // Predicated region
  $region26: #{gru_forward.1} parent=0 // pred_check
    _
  $region27: #{gru_forward.1} parent=0 // pred_check_branch
    %25 = sbr.rel (0) target = $region29
  $region28: #{gru_forward.1} parent=0 // pred_region
    _
  $region29: #{gru_forward.1} parent=0 // pred_fallthru
    _
  %v26 = vld [vmem:[%s1] ss:$4 sm:$0x3]
  %s27 = scalar_lea.vmem %s1, 1
  %v28 = vld [vmem:[%s27] ss:$4 sm:$0x3]
  %s29 = scalar_lea.vmem %s1, 2
  %v30 = vld [vmem:[%s29] ss:$4 sm:$0x3]
  %v31 = vld [vmem:[%s2] sm:$0xff]
  %v32 = vld [vmem:[%s2 + $0x8] sm:$0xff]
  %v33 = vld [vmem:[%s2 + $0x10] sm:$0xff]
  %v34 = vld [vmem:[%s2 + $0x18] sm:$0xff]
  %v35 = vld [vmem:[%s2 + $0x20] sm:$0xff]
  %v36 = vld [vmem:[%s2 + $0x28] sm:$0xff]
  %v37 = vld [vmem:[%s2 + $0x30] sm:$0xff]
  %v38 = vld [vmem:[%s2 + $0x38] sm:$0xff]
  %v39 = vld [vmem:[%s2 + $0x40] sm:$0xff]
  %v40 = vld [vmem:[%s2 + $0x48] sm:$0xff]
  %v41 = vld [vmem:[%s2 + $0x50] sm:$0xff]
  %v42 = vld [vmem:[%s2 + $0x58] sm:$0xff]
  %v43 = vld [vmem:[%s2 + $0x60] sm:$0xff]
  %v44 = vld [vmem:[%s2 + $0x68] sm:$0xff]
  %v45 = vld [vmem:[%s2 + $0x70] sm:$0xff]
  %v46 = vld [vmem:[%s2 + $0x78] sm:$0xff]
  %v47 = vld [vmem:[%s0] sm:$0xff]
  %49 = vset.pattern.permute.xlu0 0
  %50 = vperm.xlu0 %49, %v47
  %v51 = vpop.permute.xlu0 %50
  %v54 = vlaneseq
  %v55 = vshrl.u32 %v54, 7
  %v56 = vsub.s32 0, %v55
  %v57 = vrot.slane %v26, %v56
  %v58 = vlaneseq
  %v59 = vshrl.u32 %v58, 7
  %v60 = vsub.s32 1, %v59
  %v61 = vrot.slane %v26, %v60
  %v64 = vmul.f32 %v51, %v57
  %v65 = vmul.f32 %v51, %v61
  %v67 = vlaneseq
  %v68 = vshrl.u32 %v67, 7
  %v69 = vsub.s32 0, %v68
  %v70 = vrot.slane %v28, %v69
  %v71 = vlaneseq
  %v72 = vshrl.u32 %v71, 7
  %v73 = vsub.s32 1, %v72
  %v74 = vrot.slane %v28, %v73
  %v77 = vadd.f32 %v64, %v70
  %v78 = vadd.f32 %v65, %v74
  %v80 = vlaneseq
  %v81 = vshrl.u32 %v80, 7
  %v82 = vsub.s32 0, %v81
  %v83 = vrot.slane %v30, %v82
  %v84 = vlaneseq
  %v85 = vshrl.u32 %v84, 7
  %v86 = vsub.s32 1, %v85
  %v87 = vrot.slane %v30, %v86
  %vm90 = vcmask 523264
  %v92 = vsel %vm90, 0.0, 0
  %94 = vmatprep.subr.mxu0 %v32
  %95 = vmatpush1.msra.mxu0 %v31
  %96 = vmatprep.subr.mxu0 %v34
  %97 = vmatpush1.msra.mxu0 %v33
  %98 = vmatprep.subr.mxu0 %v36
  %99 = vmatpush1.msra.mxu0 %v35
  %100 = vmatprep.subr.mxu0 %v38
  %101 = vmatpush1.msra.mxu0 %v37
  %102 = vmatprep.subr.mxu0 %v40
  %103 = vmatpush1.msra.mxu0 %v39
  %104 = vmatprep.subr.mxu0 %v42
  %105 = vmatpush1.msra.mxu0 %v41
  %106 = vmatprep.subr.mxu0 %v44
  %107 = vmatpush1.msra.mxu0 %v43
  %108 = vmatprep.subr.mxu0 %v46
  %109 = vmatpush1.msra.mxu0 %v45
  %110 = vmatprep.subr.mxu0 0.0
  %111 = vmatpush1.msra.mxu0 0.0
  %112 = vmatprep.subr.mxu0 0.0
  %113 = vmatpush1.msra.mxu0 0.0
  %114 = vmatprep.subr.mxu0 0.0
  %115 = vmatpush1.msra.mxu0 0.0
  %116 = vmatprep.subr.mxu0 0.0
  %117 = vmatpush1.msra.mxu0 0.0
  %118 = vmatprep.subr.mxu0 0.0
  %119 = vmatpush1.msra.mxu0 0.0
  %120 = vmatprep.subr.mxu0 0.0
  %121 = vmatpush1.msra.mxu0 0.0
  %122 = vmatprep.subr.mxu0 0.0
  %123 = vmatpush1.msra.mxu0 0.0
  %124 = vmatprep.subr.mxu0 0.0
  %125 = vmatpush1.msra.mxu0 0.0
  %126 = vmatprep.subr.mxu0 0.0
  %127 = vmatpush1.msra.mxu0 0.0
  %128 = vmatprep.subr.mxu0 0.0
  %129 = vmatpush1.msra.mxu0 0.0
  %130 = vmatprep.subr.mxu0 0.0
  %131 = vmatpush1.msra.mxu0 0.0
  %132 = vmatprep.subr.mxu0 0.0
  %133 = vmatpush1.msra.mxu0 0.0
  %134 = vmatprep.subr.mxu0 0.0
  %135 = vmatpush1.msra.mxu0 0.0
  %136 = vmatprep.subr.mxu0 0.0
  %137 = vmatpush1.msra.mxu0 0.0
  %138 = vmatprep.subr.mxu0 0.0
  %139 = vmatpush1.msra.mxu0 0.0
  %140 = vmatprep.subr.mxu0 0.0
  %141 = vmatpush1.msra.mxu0 0.0
  %142 = vmatprep.subr.mxu0 0.0
  %143 = vmatpush1.msra.mxu0 0.0
  %144 = vmatprep.subr.mxu0 0.0
  %145 = vmatpush1.msra.mxu0 0.0
  %146 = vmatprep.subr.mxu0 0.0
  %147 = vmatpush1.msra.mxu0 0.0
  %148 = vmatprep.subr.mxu0 0.0
  %149 = vmatpush1.msra.mxu0 0.0
  %150 = vmatprep.subr.mxu0 0.0
  %151 = vmatpush1.msra.mxu0 0.0
  %152 = vmatprep.subr.mxu0 0.0
  %153 = vmatpush1.msra.mxu0 0.0
  %154 = vmatprep.subr.mxu0 0.0
  %155 = vmatpush1.msra.mxu0 0.0
  %156 = vmatprep.subr.mxu0 0.0
  %157 = vmatpush1.msra.mxu0 0.0
  %158 = vmatprep.mubr.f32.mxu0 0.0
  %159 = vmatmul.mubr.f32.gmra.mrb[0].mxu0 %v92
  %v160 = vpop.f32.mrb[0].mxu0
  %v161 = vadd.f32 %v83, %v160
  %v162 = vpop.f32.mrb[0].mxu0
  %v163 = vadd.f32 %v87, %v162
  %164 = vdwg.mxu0
  %v165 = vadd.f32 %v77, %v161
  %v166 = vxor.u32 %v165, 2147483648
  %v167 = vmul.f32 %v166, 1.442695
  %v168 = vpow.pop %v167
  %v169 = vadd.f32 %v168, 1.0
  %v170 = vrcp.pop %v169
  %v171 = vmul.f32 1.0, %v170
  %v172 = vmul.f32 %v171, %v163
  %v173 = vadd.f32 %v78, %v172
  %v174 = vtanh.pop %v173
  %v175 = vsub.f32 0.0, %v174
  %177 = vrot.lane.b32.xlu0 %v175, 64
  %v178 = vpop.permute.xlu0 %177
  %v180 = vmul.f32 %v171, %v178
  %182 = vrot.lane.b32.xlu0 %v180, 64
  %v183 = vpop.permute.xlu0 %182
  %v185 = vadd.f32 %v174, %v183
  %s186 = scalar_lea.vmem %s0, 8
  %v187 = vld [vmem:[%s186] sm:$0xff]
  %189 = vset.pattern.permute.xlu0 0
  %190 = vperm.xlu0 %189, %v187
  %v191 = vpop.permute.xlu0 %190
  %v193 = vmul.f32 %v191, %v57
  %v194 = vmul.f32 %v191, %v61
  %v195 = vadd.f32 %v193, %v70
  %v196 = vadd.f32 %v194, %v74
  %v198 = vsel %vm90, %v185, 0
  %200 = vmatprep.subr.mxu0 %v32
  %201 = vmatpush1.msra.mxu0 %v31
  %202 = vmatprep.subr.mxu0 %v34
  %203 = vmatpush1.msra.mxu0 %v33
  %204 = vmatprep.subr.mxu0 %v36
  %205 = vmatpush1.msra.mxu0 %v35
  %206 = vmatprep.subr.mxu0 %v38
  %207 = vmatpush1.msra.mxu0 %v37
  %208 = vmatprep.subr.mxu0 %v40
  %209 = vmatpush1.msra.mxu0 %v39
  %210 = vmatprep.subr.mxu0 %v42
  %211 = vmatpush1.msra.mxu0 %v41
  %212 = vmatprep.subr.mxu0 %v44
  %213 = vmatpush1.msra.mxu0 %v43
  %214 = vmatprep.subr.mxu0 %v46
  %215 = vmatpush1.msra.mxu0 %v45
  %216 = vmatprep.subr.mxu0 0.0
  %217 = vmatpush1.msra.mxu0 0.0
  %218 = vmatprep.subr.mxu0 0.0
  %219 = vmatpush1.msra.mxu0 0.0
  %220 = vmatprep.subr.mxu0 0.0
  %221 = vmatpush1.msra.mxu0 0.0
  %222 = vmatprep.subr.mxu0 0.0
  %223 = vmatpush1.msra.mxu0 0.0
  %224 = vmatprep.subr.mxu0 0.0
  %225 = vmatpush1.msra.mxu0 0.0
  %226 = vmatprep.subr.mxu0 0.0
  %227 = vmatpush1.msra.mxu0 0.0
  %228 = vmatprep.subr.mxu0 0.0
  %229 = vmatpush1.msra.mxu0 0.0
  %230 = vmatprep.subr.mxu0 0.0
  %231 = vmatpush1.msra.mxu0 0.0
  %232 = vmatprep.subr.mxu0 0.0
  %233 = vmatpush1.msra.mxu0 0.0
  %234 = vmatprep.subr.mxu0 0.0
  %235 = vmatpush1.msra.mxu0 0.0
  %236 = vmatprep.subr.mxu0 0.0
  %237 = vmatpush1.msra.mxu0 0.0
  %238 = vmatprep.subr.mxu0 0.0
  %239 = vmatpush1.msra.mxu0 0.0
  %240 = vmatprep.subr.mxu0 0.0
  %241 = vmatpush1.msra.mxu0 0.0
  %242 = vmatprep.subr.mxu0 0.0
  %243 = vmatpush1.msra.mxu0 0.0
  %244 = vmatprep.subr.mxu0 0.0
  %245 = vmatpush1.msra.mxu0 0.0
  %246 = vmatprep.subr.mxu0 0.0
  %247 = vmatpush1.msra.mxu0 0.0
  %248 = vmatprep.subr.mxu0 0.0
  %249 = vmatpush1.msra.mxu0 0.0
  %250 = vmatprep.subr.mxu0 0.0
  %251 = vmatpush1.msra.mxu0 0.0
  %252 = vmatprep.subr.mxu0 0.0
  %253 = vmatpush1.msra.mxu0 0.0
  %254 = vmatprep.subr.mxu0 0.0
  %255 = vmatpush1.msra.mxu0 0.0
  %256 = vmatprep.subr.mxu0 0.0
  %257 = vmatpush1.msra.mxu0 0.0
  %258 = vmatprep.subr.mxu0 0.0
  %259 = vmatpush1.msra.mxu0 0.0
  %260 = vmatprep.subr.mxu0 0.0
  %261 = vmatpush1.msra.mxu0 0.0
  %262 = vmatprep.subr.mxu0 0.0
  %263 = vmatpush1.msra.mxu0 0.0
  %264 = vmatprep.mubr.f32.mxu0 0.0
  %265 = vmatmul.mubr.f32.gmra.mrb[0].mxu0 %v198
  %v266 = vpop.f32.mrb[0].mxu0
  %v267 = vadd.f32 %v83, %v266
  %v268 = vpop.f32.mrb[0].mxu0
  %v269 = vadd.f32 %v87, %v268
  %270 = vdwg.mxu0
  %v271 = vadd.f32 %v195, %v267
  %v272 = vxor.u32 %v271, 2147483648
  %v273 = vmul.f32 %v272, 1.442695
  %v274 = vpow.pop %v273
  %v275 = vadd.f32 %v274, 1.0
  %v276 = vrcp.pop %v275
  %v277 = vmul.f32 1.0, %v276
  %v278 = vmul.f32 %v277, %v269
  %v279 = vadd.f32 %v196, %v278
  %v280 = vtanh.pop %v279
  %v281 = vsub.f32 %v185, %v280
  %283 = vrot.lane.b32.xlu0 %v281, 64
  %v284 = vpop.permute.xlu0 %283
  %v286 = vmul.f32 %v277, %v284
  %288 = vrot.lane.b32.xlu0 %v286, 64
  %v289 = vpop.permute.xlu0 %288
  %v291 = vadd.f32 %v280, %v289
  %s292 = scalar_lea.vmem %s0, 16
  %v293 = vld [vmem:[%s292] sm:$0xff]
  %295 = vset.pattern.permute.xlu0 0
  %296 = vperm.xlu0 %295, %v293
  %v297 = vpop.permute.xlu0 %296
  %v299 = vmul.f32 %v297, %v57
  %v300 = vmul.f32 %v297, %v61
  %v301 = vadd.f32 %v299, %v70
  %v302 = vadd.f32 %v300, %v74
  %v304 = vsel %vm90, %v291, 0
  %306 = vmatprep.subr.mxu0 %v32
  %307 = vmatpush1.msra.mxu0 %v31
  %308 = vmatprep.subr.mxu0 %v34
  %309 = vmatpush1.msra.mxu0 %v33
  %310 = vmatprep.subr.mxu0 %v36
  %311 = vmatpush1.msra.mxu0 %v35
  %312 = vmatprep.subr.mxu0 %v38
  %313 = vmatpush1.msra.mxu0 %v37
  %314 = vmatprep.subr.mxu0 %v40
  %315 = vmatpush1.msra.mxu0 %v39
  %316 = vmatprep.subr.mxu0 %v42
  %317 = vmatpush1.msra.mxu0 %v41
  %318 = vmatprep.subr.mxu0 %v44
  %319 = vmatpush1.msra.mxu0 %v43
  %320 = vmatprep.subr.mxu0 %v46
  %321 = vmatpush1.msra.mxu0 %v45
  %322 = vmatprep.subr.mxu0 0.0
  %323 = vmatpush1.msra.mxu0 0.0
  %324 = vmatprep.subr.mxu0 0.0
  %325 = vmatpush1.msra.mxu0 0.0
  %326 = vmatprep.subr.mxu0 0.0
  %327 = vmatpush1.msra.mxu0 0.0
  %328 = vmatprep.subr.mxu0 0.0
  %329 = vmatpush1.msra.mxu0 0.0
  %330 = vmatprep.subr.mxu0 0.0
  %331 = vmatpush1.msra.mxu0 0.0
  %332 = vmatprep.subr.mxu0 0.0
  %333 = vmatpush1.msra.mxu0 0.0
  %334 = vmatprep.subr.mxu0 0.0
  %335 = vmatpush1.msra.mxu0 0.0
  %336 = vmatprep.subr.mxu0 0.0
  %337 = vmatpush1.msra.mxu0 0.0
  %338 = vmatprep.subr.mxu0 0.0
  %339 = vmatpush1.msra.mxu0 0.0
  %340 = vmatprep.subr.mxu0 0.0
  %341 = vmatpush1.msra.mxu0 0.0
  %342 = vmatprep.subr.mxu0 0.0
  %343 = vmatpush1.msra.mxu0 0.0
  %344 = vmatprep.subr.mxu0 0.0
  %345 = vmatpush1.msra.mxu0 0.0
  %346 = vmatprep.subr.mxu0 0.0
  %347 = vmatpush1.msra.mxu0 0.0
  %348 = vmatprep.subr.mxu0 0.0
  %349 = vmatpush1.msra.mxu0 0.0
  %350 = vmatprep.subr.mxu0 0.0
  %351 = vmatpush1.msra.mxu0 0.0
  %352 = vmatprep.subr.mxu0 0.0
  %353 = vmatpush1.msra.mxu0 0.0
  %354 = vmatprep.subr.mxu0 0.0
  %355 = vmatpush1.msra.mxu0 0.0
  %356 = vmatprep.subr.mxu0 0.0
  %357 = vmatpush1.msra.mxu0 0.0
  %358 = vmatprep.subr.mxu0 0.0
  %359 = vmatpush1.msra.mxu0 0.0
  %360 = vmatprep.subr.mxu0 0.0
  %361 = vmatpush1.msra.mxu0 0.0
  %362 = vmatprep.subr.mxu0 0.0
  %363 = vmatpush1.msra.mxu0 0.0
  %364 = vmatprep.subr.mxu0 0.0
  %365 = vmatpush1.msra.mxu0 0.0
  %366 = vmatprep.subr.mxu0 0.0
  %367 = vmatpush1.msra.mxu0 0.0
  %368 = vmatprep.subr.mxu0 0.0
  %369 = vmatpush1.msra.mxu0 0.0
  %370 = vmatprep.mubr.f32.mxu0 0.0
  %371 = vmatmul.mubr.f32.gmra.mrb[0].mxu0 %v304
  %v372 = vpop.f32.mrb[0].mxu0
  %v373 = vadd.f32 %v83, %v372
  %v374 = vpop.f32.mrb[0].mxu0
  %v375 = vadd.f32 %v87, %v374
  %376 = vdwg.mxu0
  %v377 = vadd.f32 %v301, %v373
  %v378 = vxor.u32 %v377, 2147483648
  %v379 = vmul.f32 %v378, 1.442695
  %v380 = vpow.pop %v379
  %v381 = vadd.f32 %v380, 1.0
  %v382 = vrcp.pop %v381
  %v383 = vmul.f32 1.0, %v382
  %v384 = vmul.f32 %v383, %v375
  %v385 = vadd.f32 %v302, %v384
  %v386 = vtanh.pop %v385
  %v387 = vsub.f32 %v291, %v386
  %389 = vrot.lane.b32.xlu0 %v387, 64
  %v390 = vpop.permute.xlu0 %389
  %v392 = vmul.f32 %v383, %v390
  %394 = vrot.lane.b32.xlu0 %v392, 64
  %v395 = vpop.permute.xlu0 %394
  %v397 = vadd.f32 %v386, %v395
  %s398 = scalar_lea.vmem %s0, 24
  %v399 = vld [vmem:[%s398] sm:$0xff]
  %401 = vset.pattern.permute.xlu0 0
  %402 = vperm.xlu0 %401, %v399
  %v403 = vpop.permute.xlu0 %402
  %v405 = vmul.f32 %v403, %v57
  %v406 = vmul.f32 %v403, %v61
  %v407 = vadd.f32 %v405, %v70
  %v408 = vadd.f32 %v406, %v74
  %v410 = vsel %vm90, %v397, 0
  %412 = vmatprep.subr.mxu0 %v32
  %413 = vmatpush1.msra.mxu0 %v31
  %414 = vmatprep.subr.mxu0 %v34
  %415 = vmatpush1.msra.mxu0 %v33
  %416 = vmatprep.subr.mxu0 %v36
  %417 = vmatpush1.msra.mxu0 %v35
  %418 = vmatprep.subr.mxu0 %v38
  %419 = vmatpush1.msra.mxu0 %v37
  %420 = vmatprep.subr.mxu0 %v40
  %421 = vmatpush1.msra.mxu0 %v39
  %422 = vmatprep.subr.mxu0 %v42
  %423 = vmatpush1.msra.mxu0 %v41
  %424 = vmatprep.subr.mxu0 %v44
  %425 = vmatpush1.msra.mxu0 %v43
  %426 = vmatprep.subr.mxu0 %v46
  %427 = vmatpush1.msra.mxu0 %v45
  %428 = vmatprep.subr.mxu0 0.0
  %429 = vmatpush1.msra.mxu0 0.0
  %430 = vmatprep.subr.mxu0 0.0
  %431 = vmatpush1.msra.mxu0 0.0
  %432 = vmatprep.subr.mxu0 0.0
  %433 = vmatpush1.msra.mxu0 0.0
  %434 = vmatprep.subr.mxu0 0.0
  %435 = vmatpush1.msra.mxu0 0.0
  %436 = vmatprep.subr.mxu0 0.0
  %437 = vmatpush1.msra.mxu0 0.0
  %438 = vmatprep.subr.mxu0 0.0
  %439 = vmatpush1.msra.mxu0 0.0
  %440 = vmatprep.subr.mxu0 0.0
  %441 = vmatpush1.msra.mxu0 0.0
  %442 = vmatprep.subr.mxu0 0.0
  %443 = vmatpush1.msra.mxu0 0.0
  %444 = vmatprep.subr.mxu0 0.0
  %445 = vmatpush1.msra.mxu0 0.0
  %446 = vmatprep.subr.mxu0 0.0
  %447 = vmatpush1.msra.mxu0 0.0
  %448 = vmatprep.subr.mxu0 0.0
  %449 = vmatpush1.msra.mxu0 0.0
  %450 = vmatprep.subr.mxu0 0.0
  %451 = vmatpush1.msra.mxu0 0.0
  %452 = vmatprep.subr.mxu0 0.0
  %453 = vmatpush1.msra.mxu0 0.0
  %454 = vmatprep.subr.mxu0 0.0
  %455 = vmatpush1.msra.mxu0 0.0
  %456 = vmatprep.subr.mxu0 0.0
  %457 = vmatpush1.msra.mxu0 0.0
  %458 = vmatprep.subr.mxu0 0.0
  %459 = vmatpush1.msra.mxu0 0.0
  %460 = vmatprep.subr.mxu0 0.0
  %461 = vmatpush1.msra.mxu0 0.0
  %462 = vmatprep.subr.mxu0 0.0
  %463 = vmatpush1.msra.mxu0 0.0
  %464 = vmatprep.subr.mxu0 0.0
  %465 = vmatpush1.msra.mxu0 0.0
  %466 = vmatprep.subr.mxu0 0.0
  %467 = vmatpush1.msra.mxu0 0.0
  %468 = vmatprep.subr.mxu0 0.0
  %469 = vmatpush1.msra.mxu0 0.0
  %470 = vmatprep.subr.mxu0 0.0
  %471 = vmatpush1.msra.mxu0 0.0
  %472 = vmatprep.subr.mxu0 0.0
  %473 = vmatpush1.msra.mxu0 0.0
  %474 = vmatprep.subr.mxu0 0.0
  %475 = vmatpush1.msra.mxu0 0.0
  %476 = vmatprep.mubr.f32.mxu0 0.0
  %477 = vmatmul.mubr.f32.gmra.mrb[0].mxu0 %v410
  %v478 = vpop.f32.mrb[0].mxu0
  %v479 = vadd.f32 %v83, %v478
  %v480 = vpop.f32.mrb[0].mxu0
  %v481 = vadd.f32 %v87, %v480
  %482 = vdwg.mxu0
  %v483 = vadd.f32 %v407, %v479
  %v484 = vxor.u32 %v483, 2147483648
  %v485 = vmul.f32 %v484, 1.442695
  %v486 = vpow.pop %v485
  %v487 = vadd.f32 %v486, 1.0
  %v488 = vrcp.pop %v487
  %v489 = vmul.f32 1.0, %v488
  %v490 = vmul.f32 %v489, %v481
  %v491 = vadd.f32 %v408, %v490
  %v492 = vtanh.pop %v491
  %v493 = vsub.f32 %v397, %v492
  %495 = vrot.lane.b32.xlu0 %v493, 64
  %v496 = vpop.permute.xlu0 %495
  %v498 = vmul.f32 %v489, %v496
  %500 = vrot.lane.b32.xlu0 %v498, 64
  %v501 = vpop.permute.xlu0 %500
  %v503 = vadd.f32 %v492, %v501
  %s504 = scalar_lea.vmem %s0, 32
  %v505 = vld [vmem:[%s504] sm:$0xff]
  %507 = vset.pattern.permute.xlu0 0
  %508 = vperm.xlu0 %507, %v505
  %v509 = vpop.permute.xlu0 %508
  %v511 = vmul.f32 %v509, %v57
  %v512 = vmul.f32 %v509, %v61
  %v513 = vadd.f32 %v511, %v70
  %v514 = vadd.f32 %v512, %v74
  %v516 = vsel %vm90, %v503, 0
  %518 = vmatprep.subr.mxu0 %v32
  %519 = vmatpush1.msra.mxu0 %v31
  %520 = vmatprep.subr.mxu0 %v34
  %521 = vmatpush1.msra.mxu0 %v33
  %522 = vmatprep.subr.mxu0 %v36
  %523 = vmatpush1.msra.mxu0 %v35
  %524 = vmatprep.subr.mxu0 %v38
  %525 = vmatpush1.msra.mxu0 %v37
  %526 = vmatprep.subr.mxu0 %v40
  %527 = vmatpush1.msra.mxu0 %v39
  %528 = vmatprep.subr.mxu0 %v42
  %529 = vmatpush1.msra.mxu0 %v41
  %530 = vmatprep.subr.mxu0 %v44
  %531 = vmatpush1.msra.mxu0 %v43
  %532 = vmatprep.subr.mxu0 %v46
  %533 = vmatpush1.msra.mxu0 %v45
  %534 = vmatprep.subr.mxu0 0.0
  %535 = vmatpush1.msra.mxu0 0.0
  %536 = vmatprep.subr.mxu0 0.0
  %537 = vmatpush1.msra.mxu0 0.0
  %538 = vmatprep.subr.mxu0 0.0
  %539 = vmatpush1.msra.mxu0 0.0
  %540 = vmatprep.subr.mxu0 0.0
  %541 = vmatpush1.msra.mxu0 0.0
  %542 = vmatprep.subr.mxu0 0.0
  %543 = vmatpush1.msra.mxu0 0.0
  %544 = vmatprep.subr.mxu0 0.0
  %545 = vmatpush1.msra.mxu0 0.0
  %546 = vmatprep.subr.mxu0 0.0
  %547 = vmatpush1.msra.mxu0 0.0
  %548 = vmatprep.subr.mxu0 0.0
  %549 = vmatpush1.msra.mxu0 0.0
  %550 = vmatprep.subr.mxu0 0.0
  %551 = vmatpush1.msra.mxu0 0.0
  %552 = vmatprep.subr.mxu0 0.0
  %553 = vmatpush1.msra.mxu0 0.0
  %554 = vmatprep.subr.mxu0 0.0
  %555 = vmatpush1.msra.mxu0 0.0
  %556 = vmatprep.subr.mxu0 0.0
  %557 = vmatpush1.msra.mxu0 0.0
  %558 = vmatprep.subr.mxu0 0.0
  %559 = vmatpush1.msra.mxu0 0.0
  %560 = vmatprep.subr.mxu0 0.0
  %561 = vmatpush1.msra.mxu0 0.0
  %562 = vmatprep.subr.mxu0 0.0
  %563 = vmatpush1.msra.mxu0 0.0
  %564 = vmatprep.subr.mxu0 0.0
  %565 = vmatpush1.msra.mxu0 0.0
  %566 = vmatprep.subr.mxu0 0.0
  %567 = vmatpush1.msra.mxu0 0.0
  %568 = vmatprep.subr.mxu0 0.0
  %569 = vmatpush1.msra.mxu0 0.0
  %570 = vmatprep.subr.mxu0 0.0
  %571 = vmatpush1.msra.mxu0 0.0
  %572 = vmatprep.subr.mxu0 0.0
  %573 = vmatpush1.msra.mxu0 0.0
  %574 = vmatprep.subr.mxu0 0.0
  %575 = vmatpush1.msra.mxu0 0.0
  %576 = vmatprep.subr.mxu0 0.0
  %577 = vmatpush1.msra.mxu0 0.0
  %578 = vmatprep.subr.mxu0 0.0
  %579 = vmatpush1.msra.mxu0 0.0
  %580 = vmatprep.subr.mxu0 0.0
  %581 = vmatpush1.msra.mxu0 0.0
  %582 = vmatprep.mubr.f32.mxu0 0.0
  %583 = vmatmul.mubr.f32.gmra.mrb[0].mxu0 %v516
  %v584 = vpop.f32.mrb[0].mxu0
  %v585 = vadd.f32 %v83, %v584
  %v586 = vpop.f32.mrb[0].mxu0
  %v587 = vadd.f32 %v87, %v586
  %588 = vdwg.mxu0
  %v589 = vadd.f32 %v513, %v585
  %v590 = vxor.u32 %v589, 2147483648
  %v591 = vmul.f32 %v590, 1.442695
  %v592 = vpow.pop %v591
  %v593 = vadd.f32 %v592, 1.0
  %v594 = vrcp.pop %v593
  %v595 = vmul.f32 1.0, %v594
  %v596 = vmul.f32 %v595, %v587
  %v597 = vadd.f32 %v514, %v596
  %v598 = vtanh.pop %v597
  %v599 = vsub.f32 %v503, %v598
  %601 = vrot.lane.b32.xlu0 %v599, 64
  %v602 = vpop.permute.xlu0 %601
  %v604 = vmul.f32 %v595, %v602
  %606 = vrot.lane.b32.xlu0 %v604, 64
  %v607 = vpop.permute.xlu0 %606
  %v609 = vadd.f32 %v598, %v607
  %s610 = scalar_lea.vmem %s0, 40
  %v611 = vld [vmem:[%s610] sm:$0xff]
  %613 = vset.pattern.permute.xlu0 0
  %614 = vperm.xlu0 %613, %v611
  %v615 = vpop.permute.xlu0 %614
  %v617 = vmul.f32 %v615, %v57
  %v618 = vmul.f32 %v615, %v61
  %v619 = vadd.f32 %v617, %v70
  %v620 = vadd.f32 %v618, %v74
  %v622 = vsel %vm90, %v609, 0
  %624 = vmatprep.subr.mxu0 %v32
  %625 = vmatpush1.msra.mxu0 %v31
  %626 = vmatprep.subr.mxu0 %v34
  %627 = vmatpush1.msra.mxu0 %v33
  %628 = vmatprep.subr.mxu0 %v36
  %629 = vmatpush1.msra.mxu0 %v35
  %630 = vmatprep.subr.mxu0 %v38
  %631 = vmatpush1.msra.mxu0 %v37
  %632 = vmatprep.subr.mxu0 %v40
  %633 = vmatpush1.msra.mxu0 %v39
  %634 = vmatprep.subr.mxu0 %v42
  %635 = vmatpush1.msra.mxu0 %v41
  %636 = vmatprep.subr.mxu0 %v44
  %637 = vmatpush1.msra.mxu0 %v43
  %638 = vmatprep.subr.mxu0 %v46
  %639 = vmatpush1.msra.mxu0 %v45
  %640 = vmatprep.subr.mxu0 0.0
  %641 = vmatpush1.msra.mxu0 0.0
  %642 = vmatprep.subr.mxu0 0.0
  %643 = vmatpush1.msra.mxu0 0.0
  %644 = vmatprep.subr.mxu0 0.0
  %645 = vmatpush1.msra.mxu0 0.0
  %646 = vmatprep.subr.mxu0 0.0
  %647 = vmatpush1.msra.mxu0 0.0
  %648 = vmatprep.subr.mxu0 0.0
  %649 = vmatpush1.msra.mxu0 0.0
  %650 = vmatprep.subr.mxu0 0.0
  %651 = vmatpush1.msra.mxu0 0.0
  %652 = vmatprep.subr.mxu0 0.0
  %653 = vmatpush1.msra.mxu0 0.0
  %654 = vmatprep.subr.mxu0 0.0
  %655 = vmatpush1.msra.mxu0 0.0
  %656 = vmatprep.subr.mxu0 0.0
  %657 = vmatpush1.msra.mxu0 0.0
  %658 = vmatprep.subr.mxu0 0.0
  %659 = vmatpush1.msra.mxu0 0.0
  %660 = vmatprep.subr.mxu0 0.0
  %661 = vmatpush1.msra.mxu0 0.0
  %662 = vmatprep.subr.mxu0 0.0
  %663 = vmatpush1.msra.mxu0 0.0
  %664 = vmatprep.subr.mxu0 0.0
  %665 = vmatpush1.msra.mxu0 0.0
  %666 = vmatprep.subr.mxu0 0.0
  %667 = vmatpush1.msra.mxu0 0.0
  %668 = vmatprep.subr.mxu0 0.0
  %669 = vmatpush1.msra.mxu0 0.0
  %670 = vmatprep.subr.mxu0 0.0
  %671 = vmatpush1.msra.mxu0 0.0
  %672 = vmatprep.subr.mxu0 0.0
  %673 = vmatpush1.msra.mxu0 0.0
  %674 = vmatprep.subr.mxu0 0.0
  %675 = vmatpush1.msra.mxu0 0.0
  %676 = vmatprep.subr.mxu0 0.0
  %677 = vmatpush1.msra.mxu0 0.0
  %678 = vmatprep.subr.mxu0 0.0
  %679 = vmatpush1.msra.mxu0 0.0
  %680 = vmatprep.subr.mxu0 0.0
  %681 = vmatpush1.msra.mxu0 0.0
  %682 = vmatprep.subr.mxu0 0.0
  %683 = vmatpush1.msra.mxu0 0.0
  %684 = vmatprep.subr.mxu0 0.0
  %685 = vmatpush1.msra.mxu0 0.0
  %686 = vmatprep.subr.mxu0 0.0
  %687 = vmatpush1.msra.mxu0 0.0
  %688 = vmatprep.mubr.f32.mxu0 0.0
  %689 = vmatmul.mubr.f32.gmra.mrb[0].mxu0 %v622
  %v690 = vpop.f32.mrb[0].mxu0
  %v691 = vadd.f32 %v83, %v690
  %v692 = vpop.f32.mrb[0].mxu0
  %v693 = vadd.f32 %v87, %v692
  %694 = vdwg.mxu0
  %v695 = vadd.f32 %v619, %v691
  %v696 = vxor.u32 %v695, 2147483648
  %v697 = vmul.f32 %v696, 1.442695
  %v698 = vpow.pop %v697
  %v699 = vadd.f32 %v698, 1.0
  %v700 = vrcp.pop %v699
  %v701 = vmul.f32 1.0, %v700
  %v702 = vmul.f32 %v701, %v693
  %v703 = vadd.f32 %v620, %v702
  %v704 = vtanh.pop %v703
  %v705 = vsub.f32 %v609, %v704
  %707 = vrot.lane.b32.xlu0 %v705, 64
  %v708 = vpop.permute.xlu0 %707
  %v710 = vmul.f32 %v701, %v708
  %712 = vrot.lane.b32.xlu0 %v710, 64
  %v713 = vpop.permute.xlu0 %712
  %v715 = vadd.f32 %v704, %v713
  %s716 = scalar_lea.vmem %s0, 48
  %v717 = vld [vmem:[%s716] sm:$0xff]
  %719 = vset.pattern.permute.xlu0 0
  %720 = vperm.xlu0 %719, %v717
  %v721 = vpop.permute.xlu0 %720
  %v723 = vmul.f32 %v721, %v57
  %v724 = vmul.f32 %v721, %v61
  %v725 = vadd.f32 %v723, %v70
  %v726 = vadd.f32 %v724, %v74
  %v728 = vsel %vm90, %v715, 0
  %730 = vmatprep.subr.mxu0 %v32
  %731 = vmatpush1.msra.mxu0 %v31
  %732 = vmatprep.subr.mxu0 %v34
  %733 = vmatpush1.msra.mxu0 %v33
  %734 = vmatprep.subr.mxu0 %v36
  %735 = vmatpush1.msra.mxu0 %v35
  %736 = vmatprep.subr.mxu0 %v38
  %737 = vmatpush1.msra.mxu0 %v37
  %738 = vmatprep.subr.mxu0 %v40
  %739 = vmatpush1.msra.mxu0 %v39
  %740 = vmatprep.subr.mxu0 %v42
  %741 = vmatpush1.msra.mxu0 %v41
  %742 = vmatprep.subr.mxu0 %v44
  %743 = vmatpush1.msra.mxu0 %v43
  %744 = vmatprep.subr.mxu0 %v46
  %745 = vmatpush1.msra.mxu0 %v45
  %746 = vmatprep.subr.mxu0 0.0
  %747 = vmatpush1.msra.mxu0 0.0
  %748 = vmatprep.subr.mxu0 0.0
  %749 = vmatpush1.msra.mxu0 0.0
  %750 = vmatprep.subr.mxu0 0.0
  %751 = vmatpush1.msra.mxu0 0.0
  %752 = vmatprep.subr.mxu0 0.0
  %753 = vmatpush1.msra.mxu0 0.0
  %754 = vmatprep.subr.mxu0 0.0
  %755 = vmatpush1.msra.mxu0 0.0
  %756 = vmatprep.subr.mxu0 0.0
  %757 = vmatpush1.msra.mxu0 0.0
  %758 = vmatprep.subr.mxu0 0.0
  %759 = vmatpush1.msra.mxu0 0.0
  %760 = vmatprep.subr.mxu0 0.0
  %761 = vmatpush1.msra.mxu0 0.0
  %762 = vmatprep.subr.mxu0 0.0
  %763 = vmatpush1.msra.mxu0 0.0
  %764 = vmatprep.subr.mxu0 0.0
  %765 = vmatpush1.msra.mxu0 0.0
  %766 = vmatprep.subr.mxu0 0.0
  %767 = vmatpush1.msra.mxu0 0.0
  %768 = vmatprep.subr.mxu0 0.0
  %769 = vmatpush1.msra.mxu0 0.0
  %770 = vmatprep.subr.mxu0 0.0
  %771 = vmatpush1.msra.mxu0 0.0
  %772 = vmatprep.subr.mxu0 0.0
  %773 = vmatpush1.msra.mxu0 0.0
  %774 = vmatprep.subr.mxu0 0.0
  %775 = vmatpush1.msra.mxu0 0.0
  %776 = vmatprep.subr.mxu0 0.0
  %777 = vmatpush1.msra.mxu0 0.0
  %778 = vmatprep.subr.mxu0 0.0
  %779 = vmatpush1.msra.mxu0 0.0
  %780 = vmatprep.subr.mxu0 0.0
  %781 = vmatpush1.msra.mxu0 0.0
  %782 = vmatprep.subr.mxu0 0.0
  %783 = vmatpush1.msra.mxu0 0.0
  %784 = vmatprep.subr.mxu0 0.0
  %785 = vmatpush1.msra.mxu0 0.0
  %786 = vmatprep.subr.mxu0 0.0
  %787 = vmatpush1.msra.mxu0 0.0
  %788 = vmatprep.subr.mxu0 0.0
  %789 = vmatpush1.msra.mxu0 0.0
  %790 = vmatprep.subr.mxu0 0.0
  %791 = vmatpush1.msra.mxu0 0.0
  %792 = vmatprep.subr.mxu0 0.0
  %793 = vmatpush1.msra.mxu0 0.0
  %794 = vmatprep.mubr.f32.mxu0 0.0
  %795 = vmatmul.mubr.f32.gmra.mrb[0].mxu0 %v728
  %v796 = vpop.f32.mrb[0].mxu0
  %v797 = vadd.f32 %v83, %v796
  %v798 = vpop.f32.mrb[0].mxu0
  %v799 = vadd.f32 %v87, %v798
  %800 = vdwg.mxu0
  %v801 = vadd.f32 %v725, %v797
  %v802 = vxor.u32 %v801, 2147483648
  %v803 = vmul.f32 %v802, 1.442695
  %v804 = vpow.pop %v803
  %v805 = vadd.f32 %v804, 1.0
  %v806 = vrcp.pop %v805
  %v807 = vmul.f32 1.0, %v806
  %v808 = vmul.f32 %v807, %v799
  %v809 = vadd.f32 %v726, %v808
  %v810 = vtanh.pop %v809
  %v811 = vsub.f32 %v715, %v810
  %813 = vrot.lane.b32.xlu0 %v811, 64
  %v814 = vpop.permute.xlu0 %813
  %v816 = vmul.f32 %v807, %v814
  %818 = vrot.lane.b32.xlu0 %v816, 64
  %v819 = vpop.permute.xlu0 %818
  %v821 = vadd.f32 %v810, %v819
  %s822 = scalar_lea.vmem %s0, 56
  %v823 = vld [vmem:[%s822] sm:$0xff]
  %825 = vset.pattern.permute.xlu0 0
  %826 = vperm.xlu0 %825, %v823
  %v827 = vpop.permute.xlu0 %826
  %v829 = vmul.f32 %v827, %v57
  %v830 = vmul.f32 %v827, %v61
  %v831 = vadd.f32 %v829, %v70
  %v832 = vadd.f32 %v830, %v74
  %v834 = vsel %vm90, %v821, 0
  %836 = vmatprep.subr.mxu0 %v32
  %837 = vmatpush1.msra.mxu0 %v31
  %838 = vmatprep.subr.mxu0 %v34
  %839 = vmatpush1.msra.mxu0 %v33
  %840 = vmatprep.subr.mxu0 %v36
  %841 = vmatpush1.msra.mxu0 %v35
  %842 = vmatprep.subr.mxu0 %v38
  %843 = vmatpush1.msra.mxu0 %v37
  %844 = vmatprep.subr.mxu0 %v40
  %845 = vmatpush1.msra.mxu0 %v39
  %846 = vmatprep.subr.mxu0 %v42
  %847 = vmatpush1.msra.mxu0 %v41
  %848 = vmatprep.subr.mxu0 %v44
  %849 = vmatpush1.msra.mxu0 %v43
  %850 = vmatprep.subr.mxu0 %v46
  %851 = vmatpush1.msra.mxu0 %v45
  %852 = vmatprep.subr.mxu0 0.0
  %853 = vmatpush1.msra.mxu0 0.0
  %854 = vmatprep.subr.mxu0 0.0
  %855 = vmatpush1.msra.mxu0 0.0
  %856 = vmatprep.subr.mxu0 0.0
  %857 = vmatpush1.msra.mxu0 0.0
  %858 = vmatprep.subr.mxu0 0.0
  %859 = vmatpush1.msra.mxu0 0.0
  %860 = vmatprep.subr.mxu0 0.0
  %861 = vmatpush1.msra.mxu0 0.0
  %862 = vmatprep.subr.mxu0 0.0
  %863 = vmatpush1.msra.mxu0 0.0
  %864 = vmatprep.subr.mxu0 0.0
  %865 = vmatpush1.msra.mxu0 0.0
  %866 = vmatprep.subr.mxu0 0.0
  %867 = vmatpush1.msra.mxu0 0.0
  %868 = vmatprep.subr.mxu0 0.0
  %869 = vmatpush1.msra.mxu0 0.0
  %870 = vmatprep.subr.mxu0 0.0
  %871 = vmatpush1.msra.mxu0 0.0
  %872 = vmatprep.subr.mxu0 0.0
  %873 = vmatpush1.msra.mxu0 0.0
  %874 = vmatprep.subr.mxu0 0.0
  %875 = vmatpush1.msra.mxu0 0.0
  %876 = vmatprep.subr.mxu0 0.0
  %877 = vmatpush1.msra.mxu0 0.0
  %878 = vmatprep.subr.mxu0 0.0
  %879 = vmatpush1.msra.mxu0 0.0
  %880 = vmatprep.subr.mxu0 0.0
  %881 = vmatpush1.msra.mxu0 0.0
  %882 = vmatprep.subr.mxu0 0.0
  %883 = vmatpush1.msra.mxu0 0.0
  %884 = vmatprep.subr.mxu0 0.0
  %885 = vmatpush1.msra.mxu0 0.0
  %886 = vmatprep.subr.mxu0 0.0
  %887 = vmatpush1.msra.mxu0 0.0
  %888 = vmatprep.subr.mxu0 0.0
  %889 = vmatpush1.msra.mxu0 0.0
  %890 = vmatprep.subr.mxu0 0.0
  %891 = vmatpush1.msra.mxu0 0.0
  %892 = vmatprep.subr.mxu0 0.0
  %893 = vmatpush1.msra.mxu0 0.0
  %894 = vmatprep.subr.mxu0 0.0
  %895 = vmatpush1.msra.mxu0 0.0
  %896 = vmatprep.subr.mxu0 0.0
  %897 = vmatpush1.msra.mxu0 0.0
  %898 = vmatprep.subr.mxu0 0.0
  %899 = vmatpush1.msra.mxu0 0.0
  %900 = vmatprep.mubr.f32.mxu0 0.0
  %901 = vmatmul.mubr.f32.gmra.mrb[0].mxu0 %v834
  %v902 = vpop.f32.mrb[0].mxu0
  %v903 = vadd.f32 %v83, %v902
  %v904 = vpop.f32.mrb[0].mxu0
  %v905 = vadd.f32 %v87, %v904
  %906 = vdwg.mxu0
  %v907 = vadd.f32 %v831, %v903
  %v908 = vxor.u32 %v907, 2147483648
  %v909 = vmul.f32 %v908, 1.442695
  %v910 = vpow.pop %v909
  %v911 = vadd.f32 %v910, 1.0
  %v912 = vrcp.pop %v911
  %v913 = vmul.f32 1.0, %v912
  %v914 = vmul.f32 %v913, %v905
  %v915 = vadd.f32 %v832, %v914
  %v916 = vtanh.pop %v915
  %v917 = vsub.f32 %v821, %v916
  %919 = vrot.lane.b32.xlu0 %v917, 64
  %v920 = vpop.permute.xlu0 %919
  %v922 = vmul.f32 %v913, %v920
  %924 = vrot.lane.b32.xlu0 %v922, 64
  %v925 = vpop.permute.xlu0 %924
  %v927 = vadd.f32 %v916, %v925
  %v928 = vld [vmem:[%s6] sm:$0x1]
  %v929 = vld [vmem:[%s3] sm:$0xff]
  %v930 = vld [vmem:[%s3 + $0x8] sm:$0xff]
  %v931 = vld [vmem:[%s3 + $0x10] sm:$0xff]
  %v932 = vld [vmem:[%s3 + $0x18] sm:$0xff]
  %v933 = vld [vmem:[%s3 + $0x20] sm:$0xff]
  %v934 = vld [vmem:[%s3 + $0x28] sm:$0xff]
  %v935 = vld [vmem:[%s3 + $0x30] sm:$0xff]
  %v936 = vld [vmem:[%s3 + $0x38] sm:$0xff]
  %v938 = vlaneseq
  %v939 = vshrl.u32 %v938, 7
  %v940 = vsub.s32 0, %v939
  %v941 = vrot.slane %v928, %v940
  %v944 = vsel %vm90, %v927, 0
  %946 = vmatprep.subr.mxu0 0.0
  %947 = vmatpush1.msra.mxu0 %v929
  %948 = vmatprep.subr.mxu0 0.0
  %949 = vmatpush1.msra.mxu0 %v930
  %950 = vmatprep.subr.mxu0 0.0
  %951 = vmatpush1.msra.mxu0 %v931
  %952 = vmatprep.subr.mxu0 0.0
  %953 = vmatpush1.msra.mxu0 %v932
  %954 = vmatprep.subr.mxu0 0.0
  %955 = vmatpush1.msra.mxu0 %v933
  %956 = vmatprep.subr.mxu0 0.0
  %957 = vmatpush1.msra.mxu0 %v934
  %958 = vmatprep.subr.mxu0 0.0
  %959 = vmatpush1.msra.mxu0 %v935
  %960 = vmatprep.subr.mxu0 0.0
  %961 = vmatpush1.msra.mxu0 %v936
  %962 = vmatprep.subr.mxu0 0.0
  %963 = vmatpush1.msra.mxu0 0.0
  %964 = vmatprep.subr.mxu0 0.0
  %965 = vmatpush1.msra.mxu0 0.0
  %966 = vmatprep.subr.mxu0 0.0
  %967 = vmatpush1.msra.mxu0 0.0
  %968 = vmatprep.subr.mxu0 0.0
  %969 = vmatpush1.msra.mxu0 0.0
  %970 = vmatprep.subr.mxu0 0.0
  %971 = vmatpush1.msra.mxu0 0.0
  %972 = vmatprep.subr.mxu0 0.0
  %973 = vmatpush1.msra.mxu0 0.0
  %974 = vmatprep.subr.mxu0 0.0
  %975 = vmatpush1.msra.mxu0 0.0
  %976 = vmatprep.subr.mxu0 0.0
  %977 = vmatpush1.msra.mxu0 0.0
  %978 = vmatprep.subr.mxu0 0.0
  %979 = vmatpush1.msra.mxu0 0.0
  %980 = vmatprep.subr.mxu0 0.0
  %981 = vmatpush1.msra.mxu0 0.0
  %982 = vmatprep.subr.mxu0 0.0
  %983 = vmatpush1.msra.mxu0 0.0
  %984 = vmatprep.subr.mxu0 0.0
  %985 = vmatpush1.msra.mxu0 0.0
  %986 = vmatprep.subr.mxu0 0.0
  %987 = vmatpush1.msra.mxu0 0.0
  %988 = vmatprep.subr.mxu0 0.0
  %989 = vmatpush1.msra.mxu0 0.0
  %990 = vmatprep.subr.mxu0 0.0
  %991 = vmatpush1.msra.mxu0 0.0
  %992 = vmatprep.subr.mxu0 0.0
  %993 = vmatpush1.msra.mxu0 0.0
  %994 = vmatprep.subr.mxu0 0.0
  %995 = vmatpush1.msra.mxu0 0.0
  %996 = vmatprep.subr.mxu0 0.0
  %997 = vmatpush1.msra.mxu0 0.0
  %998 = vmatprep.subr.mxu0 0.0
  %999 = vmatpush1.msra.mxu0 0.0
  %1000 = vmatprep.subr.mxu0 0.0
  %1001 = vmatpush1.msra.mxu0 0.0
  %1002 = vmatprep.subr.mxu0 0.0
  %1003 = vmatpush1.msra.mxu0 0.0
  %1004 = vmatprep.subr.mxu0 0.0
  %1005 = vmatpush1.msra.mxu0 0.0
  %1006 = vmatprep.subr.mxu0 0.0
  %1007 = vmatpush1.msra.mxu0 0.0
  %1008 = vmatprep.subr.mxu0 0.0
  %1009 = vmatpush1.msra.mxu0 0.0
  %1010 = vmatprep.mubr.f32.mxu0 0.0
  %1011 = vmatmul.mubr.f32.gmra.mrb[0].mxu0 %v944
  %v1012 = vpop.f32.mrb[0].mxu0
  %v1013 = vadd.f32 %v941, %v1012
  %v1014 = vpop.f32.mrb[0].mxu0
  %1015 = vdwg.mxu0
  %vm1016 = vcmp.gt.f32.partialorder %v1013, 0.0
  %v1017 = vmul.f32 %v1013, 0.01
  %v1018 = vsel %vm1016, %v1013, %v1017
  %v1019 = vld [vmem:[%s4] sm:$0xff]
  %v1020 = vld [vmem:[%s4 + $0x8] sm:$0xff]
  %v1021 = vld [vmem:[%s4 + $0x10] sm:$0xff]
  %v1022 = vld [vmem:[%s4 + $0x18] sm:$0xff]
  %1023 = vrot.lane.b32.xlu0 %v941, 96
  %v1024 = vpop.permute.xlu0 %1023
  %vm1026 = vcmask 261120
  %v1028 = vsel %vm1026, %v1018, 0
  %1030 = vmatprep.subr.mxu0 0.0
  %1031 = vmatpush1.msra.mxu0 %v1019
  %1032 = vmatprep.subr.mxu0 0.0
  %1033 = vmatpush1.msra.mxu0 %v1020
  %1034 = vmatprep.subr.mxu0 0.0
  %1035 = vmatpush1.msra.mxu0 %v1021
  %1036 = vmatprep.subr.mxu0 0.0
  %1037 = vmatpush1.msra.mxu0 %v1022
  %1038 = vmatprep.subr.mxu0 0.0
  %1039 = vmatpush1.msra.mxu0 0.0
  %1040 = vmatprep.subr.mxu0 0.0
  %1041 = vmatpush1.msra.mxu0 0.0
  %1042 = vmatprep.subr.mxu0 0.0
  %1043 = vmatpush1.msra.mxu0 0.0
  %1044 = vmatprep.subr.mxu0 0.0
  %1045 = vmatpush1.msra.mxu0 0.0
  %1046 = vmatprep.subr.mxu0 0.0
  %1047 = vmatpush1.msra.mxu0 0.0
  %1048 = vmatprep.subr.mxu0 0.0
  %1049 = vmatpush1.msra.mxu0 0.0
  %1050 = vmatprep.subr.mxu0 0.0
  %1051 = vmatpush1.msra.mxu0 0.0
  %1052 = vmatprep.subr.mxu0 0.0
  %1053 = vmatpush1.msra.mxu0 0.0
  %1054 = vmatprep.subr.mxu0 0.0
  %1055 = vmatpush1.msra.mxu0 0.0
  %1056 = vmatprep.subr.mxu0 0.0
  %1057 = vmatpush1.msra.mxu0 0.0
  %1058 = vmatprep.subr.mxu0 0.0
  %1059 = vmatpush1.msra.mxu0 0.0
  %1060 = vmatprep.subr.mxu0 0.0
  %1061 = vmatpush1.msra.mxu0 0.0
  %1062 = vmatprep.subr.mxu0 0.0
  %1063 = vmatpush1.msra.mxu0 0.0
  %1064 = vmatprep.subr.mxu0 0.0
  %1065 = vmatpush1.msra.mxu0 0.0
  %1066 = vmatprep.subr.mxu0 0.0
  %1067 = vmatpush1.msra.mxu0 0.0
  %1068 = vmatprep.subr.mxu0 0.0
  %1069 = vmatpush1.msra.mxu0 0.0
  %1070 = vmatprep.subr.mxu0 0.0
  %1071 = vmatpush1.msra.mxu0 0.0
  %1072 = vmatprep.subr.mxu0 0.0
  %1073 = vmatpush1.msra.mxu0 0.0
  %1074 = vmatprep.subr.mxu0 0.0
  %1075 = vmatpush1.msra.mxu0 0.0
  %1076 = vmatprep.subr.mxu0 0.0
  %1077 = vmatpush1.msra.mxu0 0.0
  %1078 = vmatprep.subr.mxu0 0.0
  %1079 = vmatpush1.msra.mxu0 0.0
  %1080 = vmatprep.subr.mxu0 0.0
  %1081 = vmatpush1.msra.mxu0 0.0
  %1082 = vmatprep.subr.mxu0 0.0
  %1083 = vmatpush1.msra.mxu0 0.0
  %1084 = vmatprep.subr.mxu0 0.0
  %1085 = vmatpush1.msra.mxu0 0.0
  %1086 = vmatprep.subr.mxu0 0.0
  %1087 = vmatpush1.msra.mxu0 0.0
  %1088 = vmatprep.subr.mxu0 0.0
  %1089 = vmatpush1.msra.mxu0 0.0
  %1090 = vmatprep.subr.mxu0 0.0
  %1091 = vmatpush1.msra.mxu0 0.0
  %1092 = vmatprep.subr.mxu0 0.0
  %1093 = vmatpush1.msra.mxu0 0.0
  %1094 = vmatprep.mubr.f32.mxu0 0.0
  %1095 = vmatmul.mubr.f32.gmra.mrb[0].mxu0 %v1028
  %v1096 = vpop.f32.mrb[0].mxu0
  %v1097 = vadd.f32 %v1024, %v1096
  %v1098 = vpop.f32.mrb[0].mxu0
  %1099 = vdwg.mxu0
  %vm1100 = vcmp.gt.f32.partialorder %v1097, 0.0
  %v1101 = vmul.f32 %v1097, 0.01
  %v1102 = vsel %vm1100, %v1097, %v1101
  %v1103 = vld [vmem:[%s5] sm:$0x1]
  %v1105 = vlaneseq
  %v1106 = vshrl.u32 %v1105, 7
  %v1107 = vsub.s32 0, %v1106
  %v1108 = vrot.slane %v1103, %v1107
  %v1110 = vmul.f32 %v1102, %v1108
  %vm1111 = vcmask 130048
  %v1112 = vsel %vm1111, %v1110, 0.0
  %1113 = vadd.xlane.f32.xlu0 %v1112
  %v1114 = vpop.xlane.xlu0 %1113
  %v1115 = vadd.f32 %v1114, %v941
  %1117 = vrot.lane.b32.xlu0 %v1115, 80
  %v1118 = vpop.permute.xlu0 %1117
  %vm1120 = vcmask 7168
  %1121 = vst.msk [vmem:[%s7] sm:$0xff] %vm1120, %v1118
  // Predicated region
  $region30: #{gru_forward.1} parent=0 // pred_check
    _
  $region31: #{gru_forward.1} parent=0 // pred_check_branch
    %1123 = sbr.rel (0) target = $region33
  $region32: #{gru_forward.1} parent=0 // pred_region
    _
  $region33: #{gru_forward.1} parent=0 // pred_fallthru
    _
  // Predicated region
  $region34: #{gru_forward.1} parent=0 // pred_check
    _
  $region35: #{gru_forward.1} parent=0 // pred_check_branch
    %1125 = sbr.rel (0) target = $region37
  $region36: #{gru_forward.1} parent=0 // pred_region
    _
  $region37: #{gru_forward.1} parent=0 // pred_fallthru
    _

</llo_original>
